<compile_context>
chip_gen: v7x
topology: tpu7x:2x2x1
jax: 0.10.0
libtpu: 0.0.40
codegen_flags: <defaults>
</compile_context>

<pallas_src>
import jax
import jax.numpy as jnp
import numpy as np
from jax import lax
from jax.experimental import pallas as pl
from jax.experimental.pallas import tpu as pltpu

NEG_SLOPE = 0.05
HIDDEN1, HIDDEN2, HIDDEN3 = 16, 24, 32
NUM_CLASSES = 2


# ---------------------------------------------------------------------------
# In-kernel helpers (traced inside the fused kernel)
# ---------------------------------------------------------------------------
def _leaky_relu(v):
    return jnp.where(v > 0, v, NEG_SLOPE * v)


def _tap_shifts(h, L):
    """h: (rows, C) with rows = TB*L (position-major, channels on lanes).
    Returns (h_prev, h_next): h_prev[r] = h[r-1] (0 where l==0 in-sample),
    h_next[r] = h[r+1] (0 where l==L-1). O(rows*C) XLU/VPU work, no matmuls."""
    rows, C = h.shape
    zero = jnp.zeros((1, C), h.dtype)
    h_prev = jnp.concatenate([zero, h[:-1, :]], axis=0)   # block edge already zeroed
    h_next = jnp.concatenate([h[1:, :], zero], axis=0)
    if rows != L:  # more than one sample per block: zero internal sample boundaries
        l = lax.broadcasted_iota(jnp.int32, (rows, 1), 0) % L
        h_prev = jnp.where(l == 0, 0.0, h_prev)
        h_next = jnp.where(l == L - 1, 0.0, h_next)
    return h_prev, h_next


def _conv_lrelu_pool(h, w_ref, pool_ref, L):
    """h: (rows, Cin); w_ref: (3, Cin, Cout) tap-major; pool_ref: VMEM (rows, Cout).
    Conv1d(k=3, pad=1) + LeakyReLU + AvgPool1d(2,2) -> (rows//2, Cout)."""
    h_prev, h_next = _tap_shifts(h, L)
    y = (jnp.dot(h_prev, w_ref[0], preferred_element_type=jnp.float32)
         + jnp.dot(h, w_ref[1], preferred_element_type=jnp.float32)
         + jnp.dot(h_next, w_ref[2], preferred_element_type=jnp.float32))
    y = _leaky_relu(y)
    # AvgPool1d(2,2): stage in VMEM scratch, read the two phases with stride-2 loads.
    pool_ref[...] = y
    half = y.shape[0] // 2
    even = pool_ref[pl.ds(0, half, stride=2), :]
    odd = pool_ref[pl.ds(1, half, stride=2), :]
    return 0.5 * (even + odd)


# ---------------------------------------------------------------------------
# Fused kernel: conv1 -> conv2 -> conv3 -> flatten -> FC1 -> LeakyReLU -> FC2
# ---------------------------------------------------------------------------
def _make_kernel(TB, L):
    L1, L2, L3 = L // 2, L // 4, L // 8

    def kernel(x_ref, wc1_ref, wc2_ref, wc3_ref, w1s_ref, b1_ref, w2t_ref, b2_ref,
               out_ref, s1, s2, s3, feat):
        a = x_ref[...]                                   # (TB*L,  Cin)
        a = _conv_lrelu_pool(a, wc1_ref, s1, L)          # (TB*L1, 16)
        a = _conv_lrelu_pool(a, wc2_ref, s2, L1)         # (TB*L2, 24)
        a = _conv_lrelu_pool(a, wc3_ref, s3, L2)         # (TB*L3, 32)

        # Flatten (torch channel-major order c*L3 + j) fused into FC1: stage the
        # final features in VMEM, then for each in-sample position j grab the rows
        # {t*L3 + j} for every sample with one stride-L3 read and contract against
        # the matching pre-permuted FC1 slice w1s[j] (prepared once on host).
        feat[...] = a
        hfc = b1_ref.shape[-1]
        acc = jnp.zeros((TB, hfc), jnp.float32)
        for j in range(L3):                              # static unroll, L3 = window//8
            rows_j = feat[pl.ds(j, TB, stride=L3), :]    # (TB, 32)
            acc = acc + jnp.dot(rows_j, w1s_ref[j],
                                preferred_element_type=jnp.float32)
        h1 = _leaky_relu(acc + b1_ref[...])
        logits = (jnp.dot(h1, w2t_ref[...], preferred_element_type=jnp.float32)
                  + b2_ref[...])
        out_ref[...] = logits.astype(out_ref.dtype)

    return kernel


# ---------------------------------------------------------------------------
# One-time parameter re-layout (hoisted out of the forward pass)
# ---------------------------------------------------------------------------
def prepare_params(params, window_size):
    L3 = window_size // 8

    def conv_taps(w):                                    # (Cout, Cin, 3) -> (3, Cin, Cout)
        return jnp.transpose(w, (2, 1, 0)).astype(jnp.float32)

    w_fc1 = params["w_fc1"].astype(jnp.float32)          # (Hfc, 32*L3), torch order c*L3+j
    hfc = w_fc1.shape[0]
    w1s = jnp.transpose(w_fc1.reshape(hfc, HIDDEN3, L3), (2, 1, 0))  # (L3, 32, Hfc)
    return {
        "wc1": conv_taps(params["w_conv1"]),
        "wc2": conv_taps(params["w_conv2"]),
        "wc3": conv_taps(params["w_conv3"]),
        "w1s": w1s,
        "b1": params["b_fc1"].reshape(1, -1).astype(jnp.float32),
        "w2t": params["w_fc2"].T.astype(jnp.float32),    # (Hfc, 2)
        "b2": params["b_fc2"].reshape(1, -1).astype(jnp.float32),
    }


# ---------------------------------------------------------------------------
# Wrapper: batch-tiled grid, whole-array weight blocks
# ---------------------------------------------------------------------------
def _full_block_spec(shape):
    nd = len(shape)
    return pl.BlockSpec(shape, lambda i, _nd=nd: (0,) * _nd)


def _pick_batch_tile(B):
    # Small batch: one grid step (lowest overhead). Large multiple-of-8 batch: 8-row
    # tiles -> bounded per-step VMEM, "parallel" axis for dual-TC (v7x), DMA overlap.
    if B <= 8 or B % 8 != 0:
        return B
    return 8


def conv_classifier_forward(x, prep):
    """x: (B, Cin, window). Returns logits (B, 2)."""
    B, Cin, L = x.shape
    assert L % 8 == 0, "window_size must be divisible by 8"
    TB = _pick_batch_tile(B)
    L3 = L // 8
    # Only per-forward glue: positions on rows / channels on lanes for the kernel.
    # TODO(synk): on v5e this transpose could move on-chip (XLU) to save an HBM pass.
    x2d = jnp.transpose(x, (0, 2, 1)).reshape(B * L, Cin).astype(jnp.float32)

    in_specs = [pl.BlockSpec((TB * L, Cin), lambda i: (i, 0))] + [
        _full_block_spec(prep[k].shape)
        for k in ("wc1", "wc2", "wc3", "w1s", "b1", "w2t", "b2")
    ]
    out_spec = pl.BlockSpec((TB, NUM_CLASSES), lambda i: (i, 0))
    scratch = [
        pltpu.VMEM((TB * L, HIDDEN1), jnp.float32),        # conv1 pre-pool stage
        pltpu.VMEM((TB * L // 2, HIDDEN2), jnp.float32),   # conv2 pre-pool stage
        pltpu.VMEM((TB * L // 4, HIDDEN3), jnp.float32),   # conv3 pre-pool stage
        pltpu.VMEM((TB * L3, HIDDEN3), jnp.float32),       # flattened features for FC1
    ]
    return pl.pallas_call(
        _make_kernel(TB, L),
        out_shape=jax.ShapeDtypeStruct((B, NUM_CLASSES), jnp.float32),
        grid_spec=pltpu.PrefetchScalarGridSpec(
            num_scalar_prefetch=0,
            grid=(B // TB,),
            in_specs=in_specs,
            out_specs=out_spec,
            scratch_shapes=scratch),
        compiler_params=pltpu.CompilerParams(dimension_semantics=("parallel",)),
    )(x2d, prep["wc1"], prep["wc2"], prep["wc3"],
      prep["w1s"], prep["b1"], prep["w2t"], prep["b2"])


# ---------------------------------------------------------------------------
# Pure-JAX reference (correctness check only)
# ---------------------------------------------------------------------------
def reference_forward(x, params):
    def block(h, w):
        y = jax.lax.conv_general_dilated(
            h, w, window_strides=(1,), padding=((1, 1),),
            dimension_numbers=("NCH", "OIH", "NCH"))
        y = jnp.where(y > 0, y, NEG_SLOPE * y)
        B, C, L = y.shape
        return y.reshape(B, C, L // 2, 2).mean(-1)

    h = block(x, params["w_conv1"])
    h = block(h, params["w_conv2"])
    h = block(h, params["w_conv3"])
    z = h.reshape(h.shape[0], -1)
    h1 = z @ params["w_fc1"].T + params["b_fc1"]
    h1 = jnp.where(h1 > 0, h1, NEG_SLOPE * h1)
    return h1 @ params["w_fc2"].T + params["b_fc2"]


def init_params(key, input_channels, window_size):
    flat = HIDDEN3 * (window_size // 8)
    h_fc = (flat + 2) // 2
    ks = jax.random.split(key, 7)
    s = 0.1
    return {
        "w_conv1": s * jax.random.normal(ks[0], (HIDDEN1, input_channels, 3), jnp.float32),
        "w_conv2": s * jax.random.normal(ks[1], (HIDDEN2, HIDDEN1, 3), jnp.float32),
        "w_conv3": s * jax.random.normal(ks[2], (HIDDEN3, HIDDEN2, 3), jnp.float32),
        "w_fc1": s * jax.random.normal(ks[3], (h_fc, flat), jnp.float32),
        "b_fc1": s * jax.random.normal(ks[4], (h_fc,), jnp.float32),
        "w_fc2": s * jax.random.normal(ks[5], (2, h_fc), jnp.float32),
        "b_fc2": s * jax.random.normal(ks[6], (2,), jnp.float32),
    }


if __name__ == "__main__":
    # Small shapes consistent with the module (window must be divisible by 8).
    batch, input_channels, window = 2, 4, 32
    key = jax.random.PRNGKey(0)
    k_x, k_p = jax.random.split(key)
    x = jax.random.normal(k_x, (batch, input_channels, window), jnp.float32)
    params = init_params(k_p, input_channels, window)
    # NOTE: latent_dim is an unused constructor arg in the torch module's forward.

    prep = prepare_params(params, window)          # hoisted: done once, not per forward
    fwd = jax.jit(conv_classifier_forward)
    out = jax.block_until_ready(fwd(x, prep))

    ref = reference_forward(x, params)
    np.testing.assert_allclose(np.asarray(out), np.asarray(ref), rtol=1e-4, atol=1e-4)
    assert out.shape == (batch, 2)
    print("KERNEL_OK")
</pallas_src>

<mosaic_0001>
module attributes {stable_mosaic.version = 11 : i64} {
  func.func @kernel(%arg0: i32, %arg1: memref<64x4xf32, #tpu.memory_space<vmem>>, %arg2: memref<3x4x16xf32, #tpu.memory_space<vmem>>, %arg3: memref<3x16x24xf32, #tpu.memory_space<vmem>>, %arg4: memref<3x24x32xf32, #tpu.memory_space<vmem>>, %arg5: memref<4x32x65xf32, #tpu.memory_space<vmem>>, %arg6: memref<1x65xf32, #tpu.memory_space<vmem>>, %arg7: memref<65x2xf32, #tpu.memory_space<vmem>>, %arg8: memref<1x2xf32, #tpu.memory_space<vmem>>, %arg9: memref<2x2xf32, #tpu.memory_space<vmem>>, %arg10: memref<64x16xf32, #tpu.memory_space<vmem>>, %arg11: memref<32x24xf32, #tpu.memory_space<vmem>>, %arg12: memref<16x32xf32, #tpu.memory_space<vmem>>, %arg13: memref<8x32xf32, #tpu.memory_space<vmem>>) attributes {dimension_semantics = [#tpu.dimension_semantics<parallel>], iteration_bounds = array<i64: 1>, scalar_prefetch = 0 : i64, scratch_operands = 4 : i64, tpu.core_type = #tpu.core_type<tc>, window_params = [{transform_indices = @transform_0, window_bounds = array<i64: 64, 4>}, {pipeline_mode = #tpu.pipeline_mode<synchronous>, transform_indices = @transform_1, window_bounds = array<i64: 3, 4, 16>}, {pipeline_mode = #tpu.pipeline_mode<synchronous>, transform_indices = @transform_2, window_bounds = array<i64: 3, 16, 24>}, {pipeline_mode = #tpu.pipeline_mode<synchronous>, transform_indices = @transform_3, window_bounds = array<i64: 3, 24, 32>}, {pipeline_mode = #tpu.pipeline_mode<synchronous>, transform_indices = @transform_4, window_bounds = array<i64: 4, 32, 65>}, {pipeline_mode = #tpu.pipeline_mode<synchronous>, transform_indices = @transform_5, window_bounds = array<i64: 1, 65>}, {pipeline_mode = #tpu.pipeline_mode<synchronous>, transform_indices = @transform_6, window_bounds = array<i64: 65, 2>}, {pipeline_mode = #tpu.pipeline_mode<synchronous>, transform_indices = @transform_7, window_bounds = array<i64: 1, 2>}, {transform_indices = @transform_8, window_bounds = array<i64: 2, 2>}]} {
    %c0 = arith.constant 0 : index
    %c0_0 = arith.constant 0 : index
    %0 = vector.load %arg1[%c0, %c0_0] : memref<64x4xf32, #tpu.memory_space<vmem>>, vector<64x4xf32>
    %cst = arith.constant 0.000000e+00 : f32
    %1 = vector.broadcast %cst : f32 to vector<1x4xf32>
    %2 = vector.extract_strided_slice %0 {offsets = [0, 0], sizes = [63, 4], strides = [1, 1]} : vector<64x4xf32> to vector<63x4xf32>
    %3 = tpu.concatenate %1, %2 in 0 : vector<1x4xf32>, vector<63x4xf32> -> vector<64x4xf32>
    %4 = vector.extract_strided_slice %0 {offsets = [1, 0], sizes = [63, 4], strides = [1, 1]} : vector<64x4xf32> to vector<63x4xf32>
    %5 = tpu.concatenate %4, %1 in 0 : vector<63x4xf32>, vector<1x4xf32> -> vector<64x4xf32>
    %6 = tpu.iota {dimensions = array<i32: 0>} : vector<64x1xi32>
    %c32_i32 = arith.constant 32 : i32
    %c0_i32 = arith.constant 0 : i32
    %7 = arith.cmpi eq, %c32_i32, %c0_i32 : i32
    %c1_i32 = arith.constant 1 : i32
    %8 = arith.select %7, %c1_i32, %c32_i32 : i32
    %9 = vector.broadcast %8 : i32 to vector<64x1xi32>
    %10 = arith.remsi %6, %9 : vector<64x1xi32>
    %c0_i32_1 = arith.constant 0 : i32
    %11 = vector.broadcast %c0_i32_1 : i32 to vector<64x1xi32>
    %12 = arith.cmpi ne, %10, %11 : vector<64x1xi32>
    %c0_i32_2 = arith.constant 0 : i32
    %13 = vector.broadcast %c0_i32_2 : i32 to vector<64x1xi32>
    %14 = arith.cmpi slt, %10, %13 : vector<64x1xi32>
    %c0_i32_3 = arith.constant 0 : i32
    %15 = arith.cmpi slt, %8, %c0_i32_3 : i32
    %16 = vector.broadcast %15 : i1 to vector<64x1xi1>
    %17 = vector.broadcast %16 : vector<64x1xi1> to vector<64x1xi1>
    %18 = arith.xori %14, %17 : vector<64x1xi1>
    %19 = arith.andi %18, %12 : vector<64x1xi1>
    %20 = vector.broadcast %8 : i32 to vector<64x1xi32>
    %21 = arith.addi %10, %20 : vector<64x1xi32>
    %22 = arith.select %19, %21, %10 : vector<64x1xi1>, vector<64x1xi32>
    %c0_i32_4 = arith.constant 0 : i32
    %23 = vector.broadcast %c0_i32_4 : i32 to vector<64x1xi32>
    %24 = arith.cmpi eq, %22, %23 : vector<64x1xi32>
    %cst_5 = arith.constant 0.000000e+00 : f32
    %25 = vector.shape_cast %24 : vector<64x1xi1> to vector<64x1xi1>
    %26 = vector.broadcast %25 : vector<64x1xi1> to vector<64x4xi1>
    %27 = vector.broadcast %cst_5 : f32 to vector<64x4xf32>
    %28 = arith.select %26, %27, %3 : vector<64x4xi1>, vector<64x4xf32>
    %c31_i32 = arith.constant 31 : i32
    %29 = vector.broadcast %c31_i32 : i32 to vector<64x1xi32>
    %30 = arith.cmpi eq, %22, %29 : vector<64x1xi32>
    %cst_6 = arith.constant 0.000000e+00 : f32
    %31 = vector.shape_cast %30 : vector<64x1xi1> to vector<64x1xi1>
    %32 = vector.broadcast %31 : vector<64x1xi1> to vector<64x4xi1>
    %33 = vector.broadcast %cst_6 : f32 to vector<64x4xf32>
    %34 = arith.select %32, %33, %5 : vector<64x4xi1>, vector<64x4xf32>
    %c0_7 = arith.constant 0 : index
    %c0_8 = arith.constant 0 : index
    %c0_9 = arith.constant 0 : index
    %35 = vector.load %arg2[%c0_7, %c0_8, %c0_9] : memref<3x4x16xf32, #tpu.memory_space<vmem>>, vector<1x4x16xf32>
    %36 = vector.shape_cast %35 : vector<1x4x16xf32> to vector<4x16xf32>
    %cst_10 = arith.constant dense<0.000000e+00> : vector<64x16xf32>
    %37 = tpu.matmul %28, %36, %cst_10 {dimension_numbers = #tpu.dot_dimension_numbers<[1], [0], [0], [1], [0, 0, 1, 1], [], []>} : vector<64x4xf32>, vector<4x16xf32>, vector<64x16xf32> -> vector<64x16xf32>
    %c1 = arith.constant 1 : index
    %c0_11 = arith.constant 0 : index
    %c0_12 = arith.constant 0 : index
    %38 = vector.load %arg2[%c1, %c0_11, %c0_12] : memref<3x4x16xf32, #tpu.memory_space<vmem>>, vector<1x4x16xf32>
    %39 = vector.shape_cast %38 : vector<1x4x16xf32> to vector<4x16xf32>
    %cst_13 = arith.constant dense<0.000000e+00> : vector<64x16xf32>
    %40 = tpu.matmul %0, %39, %cst_13 {dimension_numbers = #tpu.dot_dimension_numbers<[1], [0], [0], [1], [0, 0, 1, 1], [], []>} : vector<64x4xf32>, vector<4x16xf32>, vector<64x16xf32> -> vector<64x16xf32>
    %41 = arith.addf %37, %40 : vector<64x16xf32>
    %c2 = arith.constant 2 : index
    %c0_14 = arith.constant 0 : index
    %c0_15 = arith.constant 0 : index
    %42 = vector.load %arg2[%c2, %c0_14, %c0_15] : memref<3x4x16xf32, #tpu.memory_space<vmem>>, vector<1x4x16xf32>
    %43 = vector.shape_cast %42 : vector<1x4x16xf32> to vector<4x16xf32>
    %cst_16 = arith.constant dense<0.000000e+00> : vector<64x16xf32>
    %44 = tpu.matmul %34, %43, %cst_16 {dimension_numbers = #tpu.dot_dimension_numbers<[1], [0], [0], [1], [0, 0, 1, 1], [], []>} : vector<64x4xf32>, vector<4x16xf32>, vector<64x16xf32> -> vector<64x16xf32>
    %45 = arith.addf %41, %44 : vector<64x16xf32>
    %cst_17 = arith.constant 0.000000e+00 : f32
    %46 = vector.broadcast %cst_17 : f32 to vector<64x16xf32>
    %47 = arith.cmpf ogt, %45, %46 : vector<64x16xf32>
    %cst_18 = arith.constant 5.000000e-02 : f32
    %48 = vector.broadcast %cst_18 : f32 to vector<64x16xf32>
    %49 = arith.mulf %48, %45 : vector<64x16xf32>
    %50 = arith.select %47, %45, %49 : vector<64x16xi1>, vector<64x16xf32>
    %c0_19 = arith.constant 0 : index
    %c0_20 = arith.constant 0 : index
    %51 = vector.load %arg10[%c0_19, %c0_20] : memref<64x16xf32, #tpu.memory_space<vmem>>, vector<64x16xf32>
    tpu.vector_store %arg10[%c0_19, %c0_20], %50 {strides = array<i32>} : memref<64x16xf32, #tpu.memory_space<vmem>>, vector<64x16xf32>,
    %c0_21 = arith.constant 0 : index
    %c0_22 = arith.constant 0 : index
    %52 = tpu.strided_load %arg10[%c0_21, %c0_22] {strides = array<i32: 2, 1>} : memref<64x16xf32, #tpu.memory_space<vmem>>, vector<32x16xf32>
    %c1_23 = arith.constant 1 : index
    %c0_24 = arith.constant 0 : index
    %53 = tpu.strided_load %arg10[%c1_23, %c0_24] {strides = array<i32: 2, 1>} : memref<64x16xf32, #tpu.memory_space<vmem>>, vector<32x16xf32>
    %54 = arith.addf %52, %53 : vector<32x16xf32>
    %cst_25 = arith.constant 5.000000e-01 : f32
    %55 = vector.broadcast %cst_25 : f32 to vector<32x16xf32>
    %56 = arith.mulf %55, %54 : vector<32x16xf32>
    %cst_26 = arith.constant 0.000000e+00 : f32
    %57 = vector.broadcast %cst_26 : f32 to vector<1x16xf32>
    %58 = vector.extract_strided_slice %56 {offsets = [0, 0], sizes = [31, 16], strides = [1, 1]} : vector<32x16xf32> to vector<31x16xf32>
    %59 = tpu.concatenate %57, %58 in 0 : vector<1x16xf32>, vector<31x16xf32> -> vector<32x16xf32>
    %60 = vector.extract_strided_slice %56 {offsets = [1, 0], sizes = [31, 16], strides = [1, 1]} : vector<32x16xf32> to vector<31x16xf32>
    %61 = tpu.concatenate %60, %57 in 0 : vector<31x16xf32>, vector<1x16xf32> -> vector<32x16xf32>
    %62 = tpu.iota {dimensions = array<i32: 0>} : vector<32x1xi32>
    %c16_i32 = arith.constant 16 : i32
    %c0_i32_27 = arith.constant 0 : i32
    %63 = arith.cmpi eq, %c16_i32, %c0_i32_27 : i32
    %c1_i32_28 = arith.constant 1 : i32
    %64 = arith.select %63, %c1_i32_28, %c16_i32 : i32
    %65 = vector.broadcast %64 : i32 to vector<32x1xi32>
    %66 = arith.remsi %62, %65 : vector<32x1xi32>
    %c0_i32_29 = arith.constant 0 : i32
    %67 = vector.broadcast %c0_i32_29 : i32 to vector<32x1xi32>
    %68 = arith.cmpi ne, %66, %67 : vector<32x1xi32>
    %c0_i32_30 = arith.constant 0 : i32
    %69 = vector.broadcast %c0_i32_30 : i32 to vector<32x1xi32>
    %70 = arith.cmpi slt, %66, %69 : vector<32x1xi32>
    %c0_i32_31 = arith.constant 0 : i32
    %71 = arith.cmpi slt, %64, %c0_i32_31 : i32
    %72 = vector.broadcast %71 : i1 to vector<32x1xi1>
    %73 = vector.broadcast %72 : vector<32x1xi1> to vector<32x1xi1>
    %74 = arith.xori %70, %73 : vector<32x1xi1>
    %75 = arith.andi %74, %68 : vector<32x1xi1>
    %76 = vector.broadcast %64 : i32 to vector<32x1xi32>
    %77 = arith.addi %66, %76 : vector<32x1xi32>
    %78 = arith.select %75, %77, %66 : vector<32x1xi1>, vector<32x1xi32>
    %c0_i32_32 = arith.constant 0 : i32
    %79 = vector.broadcast %c0_i32_32 : i32 to vector<32x1xi32>
    %80 = arith.cmpi eq, %78, %79 : vector<32x1xi32>
    %cst_33 = arith.constant 0.000000e+00 : f32
    %81 = vector.shape_cast %80 : vector<32x1xi1> to vector<32x1xi1>
    %82 = vector.broadcast %81 : vector<32x1xi1> to vector<32x16xi1>
    %83 = vector.broadcast %cst_33 : f32 to vector<32x16xf32>
    %84 = arith.select %82, %83, %59 : vector<32x16xi1>, vector<32x16xf32>
    %c15_i32 = arith.constant 15 : i32
    %85 = vector.broadcast %c15_i32 : i32 to vector<32x1xi32>
    %86 = arith.cmpi eq, %78, %85 : vector<32x1xi32>
    %cst_34 = arith.constant 0.000000e+00 : f32
    %87 = vector.shape_cast %86 : vector<32x1xi1> to vector<32x1xi1>
    %88 = vector.broadcast %87 : vector<32x1xi1> to vector<32x16xi1>
    %89 = vector.broadcast %cst_34 : f32 to vector<32x16xf32>
    %90 = arith.select %88, %89, %61 : vector<32x16xi1>, vector<32x16xf32>
    %c0_35 = arith.constant 0 : index
    %c0_36 = arith.constant 0 : index
    %c0_37 = arith.constant 0 : index
    %91 = vector.load %arg3[%c0_35, %c0_36, %c0_37] : memref<3x16x24xf32, #tpu.memory_space<vmem>>, vector<1x16x24xf32>
    %92 = vector.shape_cast %91 : vector<1x16x24xf32> to vector<16x24xf32>
    %cst_38 = arith.constant dense<0.000000e+00> : vector<32x24xf32>
    %93 = tpu.matmul %84, %92, %cst_38 {dimension_numbers = #tpu.dot_dimension_numbers<[1], [0], [0], [1], [0, 0, 1, 1], [], []>} : vector<32x16xf32>, vector<16x24xf32>, vector<32x24xf32> -> vector<32x24xf32>
    %c1_39 = arith.constant 1 : index
    %c0_40 = arith.constant 0 : index
    %c0_41 = arith.constant 0 : index
    %94 = vector.load %arg3[%c1_39, %c0_40, %c0_41] : memref<3x16x24xf32, #tpu.memory_space<vmem>>, vector<1x16x24xf32>
    %95 = vector.shape_cast %94 : vector<1x16x24xf32> to vector<16x24xf32>
    %cst_42 = arith.constant dense<0.000000e+00> : vector<32x24xf32>
    %96 = tpu.matmul %56, %95, %cst_42 {dimension_numbers = #tpu.dot_dimension_numbers<[1], [0], [0], [1], [0, 0, 1, 1], [], []>} : vector<32x16xf32>, vector<16x24xf32>, vector<32x24xf32> -> vector<32x24xf32>
    %97 = arith.addf %93, %96 : vector<32x24xf32>
    %c2_43 = arith.constant 2 : index
    %c0_44 = arith.constant 0 : index
    %c0_45 = arith.constant 0 : index
    %98 = vector.load %arg3[%c2_43, %c0_44, %c0_45] : memref<3x16x24xf32, #tpu.memory_space<vmem>>, vector<1x16x24xf32>
    %99 = vector.shape_cast %98 : vector<1x16x24xf32> to vector<16x24xf32>
    %cst_46 = arith.constant dense<0.000000e+00> : vector<32x24xf32>
    %100 = tpu.matmul %90, %99, %cst_46 {dimension_numbers = #tpu.dot_dimension_numbers<[1], [0], [0], [1], [0, 0, 1, 1], [], []>} : vector<32x16xf32>, vector<16x24xf32>, vector<32x24xf32> -> vector<32x24xf32>
    %101 = arith.addf %97, %100 : vector<32x24xf32>
    %cst_47 = arith.constant 0.000000e+00 : f32
    %102 = vector.broadcast %cst_47 : f32 to vector<32x24xf32>
    %103 = arith.cmpf ogt, %101, %102 : vector<32x24xf32>
    %cst_48 = arith.constant 5.000000e-02 : f32
    %104 = vector.broadcast %cst_48 : f32 to vector<32x24xf32>
    %105 = arith.mulf %104, %101 : vector<32x24xf32>
    %106 = arith.select %103, %101, %105 : vector<32x24xi1>, vector<32x24xf32>
    %c0_49 = arith.constant 0 : index
    %c0_50 = arith.constant 0 : index
    %107 = vector.load %arg11[%c0_49, %c0_50] : memref<32x24xf32, #tpu.memory_space<vmem>>, vector<32x24xf32>
    tpu.vector_store %arg11[%c0_49, %c0_50], %106 {strides = array<i32>} : memref<32x24xf32, #tpu.memory_space<vmem>>, vector<32x24xf32>,
    %c0_51 = arith.constant 0 : index
    %c0_52 = arith.constant 0 : index
    %108 = tpu.strided_load %arg11[%c0_51, %c0_52] {strides = array<i32: 2, 1>} : memref<32x24xf32, #tpu.memory_space<vmem>>, vector<16x24xf32>
    %c1_53 = arith.constant 1 : index
    %c0_54 = arith.constant 0 : index
    %109 = tpu.strided_load %arg11[%c1_53, %c0_54] {strides = array<i32: 2, 1>} : memref<32x24xf32, #tpu.memory_space<vmem>>, vector<16x24xf32>
    %110 = arith.addf %108, %109 : vector<16x24xf32>
    %cst_55 = arith.constant 5.000000e-01 : f32
    %111 = vector.broadcast %cst_55 : f32 to vector<16x24xf32>
    %112 = arith.mulf %111, %110 : vector<16x24xf32>
    %cst_56 = arith.constant 0.000000e+00 : f32
    %113 = vector.broadcast %cst_56 : f32 to vector<1x24xf32>
    %114 = vector.extract_strided_slice %112 {offsets = [0, 0], sizes = [15, 24], strides = [1, 1]} : vector<16x24xf32> to vector<15x24xf32>
    %115 = tpu.concatenate %113, %114 in 0 : vector<1x24xf32>, vector<15x24xf32> -> vector<16x24xf32>
    %116 = vector.extract_strided_slice %112 {offsets = [1, 0], sizes = [15, 24], strides = [1, 1]} : vector<16x24xf32> to vector<15x24xf32>
    %117 = tpu.concatenate %116, %113 in 0 : vector<15x24xf32>, vector<1x24xf32> -> vector<16x24xf32>
    %118 = tpu.iota {dimensions = array<i32: 0>} : vector<16x1xi32>
    %c8_i32 = arith.constant 8 : i32
    %c0_i32_57 = arith.constant 0 : i32
    %119 = arith.cmpi eq, %c8_i32, %c0_i32_57 : i32
    %c1_i32_58 = arith.constant 1 : i32
    %120 = arith.select %119, %c1_i32_58, %c8_i32 : i32
    %121 = vector.broadcast %120 : i32 to vector<16x1xi32>
    %122 = arith.remsi %118, %121 : vector<16x1xi32>
    %c0_i32_59 = arith.constant 0 : i32
    %123 = vector.broadcast %c0_i32_59 : i32 to vector<16x1xi32>
    %124 = arith.cmpi ne, %122, %123 : vector<16x1xi32>
    %c0_i32_60 = arith.constant 0 : i32
    %125 = vector.broadcast %c0_i32_60 : i32 to vector<16x1xi32>
    %126 = arith.cmpi slt, %122, %125 : vector<16x1xi32>
    %c0_i32_61 = arith.constant 0 : i32
    %127 = arith.cmpi slt, %120, %c0_i32_61 : i32
    %128 = vector.broadcast %127 : i1 to vector<16x1xi1>
    %129 = vector.broadcast %128 : vector<16x1xi1> to vector<16x1xi1>
    %130 = arith.xori %126, %129 : vector<16x1xi1>
    %131 = arith.andi %130, %124 : vector<16x1xi1>
    %132 = vector.broadcast %120 : i32 to vector<16x1xi32>
    %133 = arith.addi %122, %132 : vector<16x1xi32>
    %134 = arith.select %131, %133, %122 : vector<16x1xi1>, vector<16x1xi32>
    %c0_i32_62 = arith.constant 0 : i32
    %135 = vector.broadcast %c0_i32_62 : i32 to vector<16x1xi32>
    %136 = arith.cmpi eq, %134, %135 : vector<16x1xi32>
    %cst_63 = arith.constant 0.000000e+00 : f32
    %137 = vector.shape_cast %136 : vector<16x1xi1> to vector<16x1xi1>
    %138 = vector.broadcast %137 : vector<16x1xi1> to vector<16x24xi1>
    %139 = vector.broadcast %cst_63 : f32 to vector<16x24xf32>
    %140 = arith.select %138, %139, %115 : vector<16x24xi1>, vector<16x24xf32>
    %c7_i32 = arith.constant 7 : i32
    %141 = vector.broadcast %c7_i32 : i32 to vector<16x1xi32>
    %142 = arith.cmpi eq, %134, %141 : vector<16x1xi32>
    %cst_64 = arith.constant 0.000000e+00 : f32
    %143 = vector.shape_cast %142 : vector<16x1xi1> to vector<16x1xi1>
    %144 = vector.broadcast %143 : vector<16x1xi1> to vector<16x24xi1>
    %145 = vector.broadcast %cst_64 : f32 to vector<16x24xf32>
    %146 = arith.select %144, %145, %117 : vector<16x24xi1>, vector<16x24xf32>
    %c0_65 = arith.constant 0 : index
    %c0_66 = arith.constant 0 : index
    %c0_67 = arith.constant 0 : index
    %147 = vector.load %arg4[%c0_65, %c0_66, %c0_67] : memref<3x24x32xf32, #tpu.memory_space<vmem>>, vector<1x24x32xf32>
    %148 = vector.shape_cast %147 : vector<1x24x32xf32> to vector<24x32xf32>
    %cst_68 = arith.constant dense<0.000000e+00> : vector<16x32xf32>
    %149 = tpu.matmul %140, %148, %cst_68 {dimension_numbers = #tpu.dot_dimension_numbers<[1], [0], [0], [1], [0, 0, 1, 1], [], []>} : vector<16x24xf32>, vector<24x32xf32>, vector<16x32xf32> -> vector<16x32xf32>
    %c1_69 = arith.constant 1 : index
    %c0_70 = arith.constant 0 : index
    %c0_71 = arith.constant 0 : index
    %150 = vector.load %arg4[%c1_69, %c0_70, %c0_71] : memref<3x24x32xf32, #tpu.memory_space<vmem>>, vector<1x24x32xf32>
    %151 = vector.shape_cast %150 : vector<1x24x32xf32> to vector<24x32xf32>
    %cst_72 = arith.constant dense<0.000000e+00> : vector<16x32xf32>
    %152 = tpu.matmul %112, %151, %cst_72 {dimension_numbers = #tpu.dot_dimension_numbers<[1], [0], [0], [1], [0, 0, 1, 1], [], []>} : vector<16x24xf32>, vector<24x32xf32>, vector<16x32xf32> -> vector<16x32xf32>
    %153 = arith.addf %149, %152 : vector<16x32xf32>
    %c2_73 = arith.constant 2 : index
    %c0_74 = arith.constant 0 : index
    %c0_75 = arith.constant 0 : index
    %154 = vector.load %arg4[%c2_73, %c0_74, %c0_75] : memref<3x24x32xf32, #tpu.memory_space<vmem>>, vector<1x24x32xf32>
    %155 = vector.shape_cast %154 : vector<1x24x32xf32> to vector<24x32xf32>
    %cst_76 = arith.constant dense<0.000000e+00> : vector<16x32xf32>
    %156 = tpu.matmul %146, %155, %cst_76 {dimension_numbers = #tpu.dot_dimension_numbers<[1], [0], [0], [1], [0, 0, 1, 1], [], []>} : vector<16x24xf32>, vector<24x32xf32>, vector<16x32xf32> -> vector<16x32xf32>
    %157 = arith.addf %153, %156 : vector<16x32xf32>
    %cst_77 = arith.constant 0.000000e+00 : f32
    %158 = vector.broadcast %cst_77 : f32 to vector<16x32xf32>
    %159 = arith.cmpf ogt, %157, %158 : vector<16x32xf32>
    %cst_78 = arith.constant 5.000000e-02 : f32
    %160 = vector.broadcast %cst_78 : f32 to vector<16x32xf32>
    %161 = arith.mulf %160, %157 : vector<16x32xf32>
    %162 = arith.select %159, %157, %161 : vector<16x32xi1>, vector<16x32xf32>
    %c0_79 = arith.constant 0 : index
    %c0_80 = arith.constant 0 : index
    %163 = vector.load %arg12[%c0_79, %c0_80] : memref<16x32xf32, #tpu.memory_space<vmem>>, vector<16x32xf32>
    tpu.vector_store %arg12[%c0_79, %c0_80], %162 {strides = array<i32>} : memref<16x32xf32, #tpu.memory_space<vmem>>, vector<16x32xf32>,
    %c0_81 = arith.constant 0 : index
    %c0_82 = arith.constant 0 : index
    %164 = tpu.strided_load %arg12[%c0_81, %c0_82] {strides = array<i32: 2, 1>} : memref<16x32xf32, #tpu.memory_space<vmem>>, vector<8x32xf32>
    %c1_83 = arith.constant 1 : index
    %c0_84 = arith.constant 0 : index
    %165 = tpu.strided_load %arg12[%c1_83, %c0_84] {strides = array<i32: 2, 1>} : memref<16x32xf32, #tpu.memory_space<vmem>>, vector<8x32xf32>
    %166 = arith.addf %164, %165 : vector<8x32xf32>
    %cst_85 = arith.constant 5.000000e-01 : f32
    %167 = vector.broadcast %cst_85 : f32 to vector<8x32xf32>
    %168 = arith.mulf %167, %166 : vector<8x32xf32>
    %c0_86 = arith.constant 0 : index
    %c0_87 = arith.constant 0 : index
    %169 = vector.load %arg13[%c0_86, %c0_87] : memref<8x32xf32, #tpu.memory_space<vmem>>, vector<8x32xf32>
    tpu.vector_store %arg13[%c0_86, %c0_87], %168 {strides = array<i32>} : memref<8x32xf32, #tpu.memory_space<vmem>>, vector<8x32xf32>,
    %cst_88 = arith.constant 0.000000e+00 : f32
    %170 = vector.broadcast %cst_88 : f32 to vector<2x65xf32>
    %c0_89 = arith.constant 0 : index
    %c0_90 = arith.constant 0 : index
    %171 = tpu.strided_load %arg13[%c0_89, %c0_90] {strides = array<i32: 4, 1>} : memref<8x32xf32, #tpu.memory_space<vmem>>, vector<2x32xf32>
    %c0_91 = arith.constant 0 : index
    %c0_92 = arith.constant 0 : index
    %c0_93 = arith.constant 0 : index
    %172 = vector.load %arg5[%c0_91, %c0_92, %c0_93] : memref<4x32x65xf32, #tpu.memory_space<vmem>>, vector<1x32x65xf32>
    %173 = vector.shape_cast %172 : vector<1x32x65xf32> to vector<32x65xf32>
    %cst_94 = arith.constant dense<0.000000e+00> : vector<2x65xf32>
    %174 = tpu.matmul %171, %173, %cst_94 {dimension_numbers = #tpu.dot_dimension_numbers<[1], [0], [0], [1], [0, 0, 1, 1], [], []>} : vector<2x32xf32>, vector<32x65xf32>, vector<2x65xf32> -> vector<2x65xf32>
    %175 = arith.addf %170, %174 : vector<2x65xf32>
    %c1_95 = arith.constant 1 : index
    %c0_96 = arith.constant 0 : index
    %176 = tpu.strided_load %arg13[%c1_95, %c0_96] {strides = array<i32: 4, 1>} : memref<8x32xf32, #tpu.memory_space<vmem>>, vector<2x32xf32>
    %c1_97 = arith.constant 1 : index
    %c0_98 = arith.constant 0 : index
    %c0_99 = arith.constant 0 : index
    %177 = vector.load %arg5[%c1_97, %c0_98, %c0_99] : memref<4x32x65xf32, #tpu.memory_space<vmem>>, vector<1x32x65xf32>
    %178 = vector.shape_cast %177 : vector<1x32x65xf32> to vector<32x65xf32>
    %cst_100 = arith.constant dense<0.000000e+00> : vector<2x65xf32>
    %179 = tpu.matmul %176, %178, %cst_100 {dimension_numbers = #tpu.dot_dimension_numbers<[1], [0], [0], [1], [0, 0, 1, 1], [], []>} : vector<2x32xf32>, vector<32x65xf32>, vector<2x65xf32> -> vector<2x65xf32>
    %180 = arith.addf %175, %179 : vector<2x65xf32>
    %c2_101 = arith.constant 2 : index
    %c0_102 = arith.constant 0 : index
    %181 = tpu.strided_load %arg13[%c2_101, %c0_102] {strides = array<i32: 4, 1>} : memref<8x32xf32, #tpu.memory_space<vmem>>, vector<2x32xf32>
    %c2_103 = arith.constant 2 : index
    %c0_104 = arith.constant 0 : index
    %c0_105 = arith.constant 0 : index
    %182 = vector.load %arg5[%c2_103, %c0_104, %c0_105] : memref<4x32x65xf32, #tpu.memory_space<vmem>>, vector<1x32x65xf32>
    %183 = vector.shape_cast %182 : vector<1x32x65xf32> to vector<32x65xf32>
    %cst_106 = arith.constant dense<0.000000e+00> : vector<2x65xf32>
    %184 = tpu.matmul %181, %183, %cst_106 {dimension_numbers = #tpu.dot_dimension_numbers<[1], [0], [0], [1], [0, 0, 1, 1], [], []>} : vector<2x32xf32>, vector<32x65xf32>, vector<2x65xf32> -> vector<2x65xf32>
    %185 = arith.addf %180, %184 : vector<2x65xf32>
    %c3 = arith.constant 3 : index
    %c0_107 = arith.constant 0 : index
    %186 = tpu.strided_load %arg13[%c3, %c0_107] {strides = array<i32: 4, 1>} : memref<8x32xf32, #tpu.memory_space<vmem>>, vector<2x32xf32>
    %c3_108 = arith.constant 3 : index
    %c0_109 = arith.constant 0 : index
    %c0_110 = arith.constant 0 : index
    %187 = vector.load %arg5[%c3_108, %c0_109, %c0_110] : memref<4x32x65xf32, #tpu.memory_space<vmem>>, vector<1x32x65xf32>
    %188 = vector.shape_cast %187 : vector<1x32x65xf32> to vector<32x65xf32>
    %cst_111 = arith.constant dense<0.000000e+00> : vector<2x65xf32>
    %189 = tpu.matmul %186, %188, %cst_111 {dimension_numbers = #tpu.dot_dimension_numbers<[1], [0], [0], [1], [0, 0, 1, 1], [], []>} : vector<2x32xf32>, vector<32x65xf32>, vector<2x65xf32> -> vector<2x65xf32>
    %190 = arith.addf %185, %189 : vector<2x65xf32>
    %c0_112 = arith.constant 0 : index
    %c0_113 = arith.constant 0 : index
    %191 = vector.load %arg6[%c0_112, %c0_113] : memref<1x65xf32, #tpu.memory_space<vmem>>, vector<1x65xf32>
    %192 = vector.broadcast %191 : vector<1x65xf32> to vector<2x65xf32>
    %193 = arith.addf %190, %192 : vector<2x65xf32>
    %cst_114 = arith.constant 0.000000e+00 : f32
    %194 = vector.broadcast %cst_114 : f32 to vector<2x65xf32>
    %195 = arith.cmpf ogt, %193, %194 : vector<2x65xf32>
    %cst_115 = arith.constant 5.000000e-02 : f32
    %196 = vector.broadcast %cst_115 : f32 to vector<2x65xf32>
    %197 = arith.mulf %196, %193 : vector<2x65xf32>
    %198 = arith.select %195, %193, %197 : vector<2x65xi1>, vector<2x65xf32>
    %c0_116 = arith.constant 0 : index
    %c0_117 = arith.constant 0 : index
    %199 = vector.load %arg7[%c0_116, %c0_117] : memref<65x2xf32, #tpu.memory_space<vmem>>, vector<65x2xf32>
    %cst_118 = arith.constant dense<0.000000e+00> : vector<2x2xf32>
    %200 = tpu.matmul %198, %199, %cst_118 {dimension_numbers = #tpu.dot_dimension_numbers<[1], [0], [0], [1], [0, 0, 1, 1], [], []>} : vector<2x65xf32>, vector<65x2xf32>, vector<2x2xf32> -> vector<2x2xf32>
    %c0_119 = arith.constant 0 : index
    %c0_120 = arith.constant 0 : index
    %201 = vector.load %arg8[%c0_119, %c0_120] : memref<1x2xf32, #tpu.memory_space<vmem>>, vector<1x2xf32>
    %202 = vector.broadcast %201 : vector<1x2xf32> to vector<2x2xf32>
    %203 = arith.addf %200, %202 : vector<2x2xf32>
    %c0_121 = arith.constant 0 : index
    %c0_122 = arith.constant 0 : index
    %204 = vector.load %arg9[%c0_121, %c0_122] : memref<2x2xf32, #tpu.memory_space<vmem>>, vector<2x2xf32>
    tpu.vector_store %arg9[%c0_121, %c0_122], %203 {strides = array<i32>} : memref<2x2xf32, #tpu.memory_space<vmem>>, vector<2x2xf32>,
    return
  }
  func.func @transform_0(%arg0: i32) -> (i32, i32) {
    %c0_i32 = arith.constant 0 : i32
    %c0_i32_0 = arith.constant 0 : i32
    return %arg0, %c0_i32 : i32, i32
  }
  func.func @transform_1(%arg0: i32) -> (i32, i32, i32) {
    %c0_i32 = arith.constant 0 : i32
    %c0_i32_0 = arith.constant 0 : i32
    %c0_i32_1 = arith.constant 0 : i32
    %c0_i32_2 = arith.constant 0 : i32
    return %c0_i32, %c0_i32_0, %c0_i32_1 : i32, i32, i32
  }
  func.func @transform_2(%arg0: i32) -> (i32, i32, i32) {
    %c0_i32 = arith.constant 0 : i32
    %c0_i32_0 = arith.constant 0 : i32
    %c0_i32_1 = arith.constant 0 : i32
    %c0_i32_2 = arith.constant 0 : i32
    return %c0_i32, %c0_i32_0, %c0_i32_1 : i32, i32, i32
  }
  func.func @transform_3(%arg0: i32) -> (i32, i32, i32) {
    %c0_i32 = arith.constant 0 : i32
    %c0_i32_0 = arith.constant 0 : i32
    %c0_i32_1 = arith.constant 0 : i32
    %c0_i32_2 = arith.constant 0 : i32
    return %c0_i32, %c0_i32_0, %c0_i32_1 : i32, i32, i32
  }
  func.func @transform_4(%arg0: i32) -> (i32, i32, i32) {
    %c0_i32 = arith.constant 0 : i32
    %c0_i32_0 = arith.constant 0 : i32
    %c0_i32_1 = arith.constant 0 : i32
    %c0_i32_2 = arith.constant 0 : i32
    return %c0_i32, %c0_i32_0, %c0_i32_1 : i32, i32, i32
  }
  func.func @transform_5(%arg0: i32) -> (i32, i32) {
    %c0_i32 = arith.constant 0 : i32
    %c0_i32_0 = arith.constant 0 : i32
    %c0_i32_1 = arith.constant 0 : i32
    return %c0_i32, %c0_i32_0 : i32, i32
  }
  func.func @transform_6(%arg0: i32) -> (i32, i32) {
    %c0_i32 = arith.constant 0 : i32
    %c0_i32_0 = arith.constant 0 : i32
    %c0_i32_1 = arith.constant 0 : i32
    return %c0_i32, %c0_i32_0 : i32, i32
  }
  func.func @transform_7(%arg0: i32) -> (i32, i32) {
    %c0_i32 = arith.constant 0 : i32
    %c0_i32_0 = arith.constant 0 : i32
    %c0_i32_1 = arith.constant 0 : i32
    return %c0_i32, %c0_i32_0 : i32, i32
  }
  func.func @transform_8(%arg0: i32) -> (i32, i32) {
    %c0_i32 = arith.constant 0 : i32
    %c0_i32_0 = arith.constant 0 : i32
    return %arg0, %c0_i32 : i32, i32
  }
}

</mosaic_0001>

<llo_original>
// kernel: conv_classifier_forward.1
$region0: #{conv_classifier_forward.1}
  #allocation0 [shape = 'u32[]', space=smem, size = 0x4, offset = 0x4, fixed_abs, tag = 'smem constant byte address 0x4 - core index']
  #allocation1 [shape = 'u32[144,128]{1,0:T(1,128)}', space=vmem, size = 0x12000, scoped, tag = 'internal scratch']
  #allocation2 [shape = 'f32[64,16]{1,0:T(8,128)}', space=vmem, size = 0x8000, scoped, tag = 'scratch operand']
  #allocation3 [shape = 'f32[32,24]{1,0:T(8,128)}', space=vmem, size = 0x4000, scoped, tag = 'scratch operand']
  #allocation4 [shape = 'f32[16,32]{1,0:T(8,128)}', space=vmem, size = 0x2000, scoped, tag = 'scratch operand']
  #allocation5 [shape = 'f32[8,32]{1,0:T(8,128)}', space=vmem, size = 0x1000, scoped, tag = 'scratch operand']
  %s0 = inlined_call_operand.vmem [shape: f32[64,4], index: 0, kind: input, shape index: {}]
  %s1 = inlined_call_operand.hbm [shape: f32[3,4,16], index: 1, kind: input, shape index: {}]
  %s2 = inlined_call_operand.vmem [shape: f32[3,16,24], index: 2, kind: input, shape index: {}]
  %s3 = inlined_call_operand.hbm [shape: f32[3,24,32], index: 3, kind: input, shape index: {}]
  %s4 = inlined_call_operand.vmem [shape: f32[4,32,65], index: 4, kind: input, shape index: {}]
  %s5 = inlined_call_operand.hbm [shape: f32[1,65], index: 5, kind: input, shape index: {}]
  %s6 = inlined_call_operand.vmem [shape: f32[65,2], index: 6, kind: input, shape index: {}]
  %s7 = inlined_call_operand.hbm [shape: f32[1,2], index: 7, kind: input, shape index: {}]
  %s8 = inlined_call_operand.hbm [shape: f32[2,2], index: 8, kind: output, shape index: {}]
  %s9 = sld [smem:[#allocation0]]
  $region58: #{conv_classifier_forward.1} parent=0
    _
  %s11 = ssub.s32 1, %s9
  %s12 = scalar_select 0, %s11, %s9
  $region1: #{conv_classifier_forward.1} parent=0
    #allocation6 [shape = 'u8[6144]{0}', space=vmem, size = 0x1800, scoped, tag = 'input window, operand 1, single buffered']
    #allocation7 [shape = 's32[1]{0}', space=sflag, size = 0x4, scoped, tag = 'scoped memory for conv_classifier_forward.1']
    #allocation8 [shape = 's32[1]{0}', space=sflag, size = 0x4, scoped, tag = 'scoped memory for conv_classifier_forward.1']
    #allocation9 [shape = 'u8[36864]{0}', space=vmem, size = 0x9000, scoped, tag = 'input window, operand 3, single buffered']
    #allocation10 [shape = 's32[1]{0}', space=sflag, size = 0x4, scoped, tag = 'scoped memory for conv_classifier_forward.1']
    #allocation11 [shape = 'u8[512]{0}', space=vmem, size = 0x400, scoped, tag = 'input window, operand 5, single buffered']
    #allocation12 [shape = 'u8[512]{0}', space=vmem, size = 0x400, scoped, tag = 'input window, operand 7, single buffered']
    #allocation13 [shape = 's32[1]{0}', space=sflag, size = 0x4, scoped, tag = 'scoped memory for conv_classifier_forward.1']
    #allocation14 [shape = 'u8[1024]{0}', space=vmem, size = 0x400, scoped, tag = 'output window, operand 0, single buffered']
    %13 = vsyncpa [#allocation7], 0
    %14 = vsyncpa [#allocation10], 0
    %15 = vsyncpa [#allocation13], 0
    %16 = vsyncpa [#allocation8], 0
    // Predicated region
    $region2: #{conv_classifier_forward.1} parent=1 // pred_check
      _
    $region3: #{conv_classifier_forward.1} parent=1 // pred_check_branch
      %18 = sbr.rel (0) target = $region5
    $region4: #{conv_classifier_forward.1} parent=1 // pred_region
      _
    $region5: #{conv_classifier_forward.1} parent=1 // pred_fallthru
      _
    // Predicated region
    $region6: #{conv_classifier_forward.1} parent=1 // pred_check
      _
    $region7: #{conv_classifier_forward.1} parent=1 // pred_check_branch
      %20 = sbr.rel (0) target = $region9
    $region8: #{conv_classifier_forward.1} parent=1 // pred_region
      %s22 = ssub.s32 192, 192
      %23 = vsyncadd [#allocation7], %s22
      %s24 = sshll.u32 [#allocation6], 4
      %s25 = int_to_ptr.vmem [resolvable:$true] %s24
      %30 = dma.hbm_to_vmem [thread:$0]  %s1, 192, %s25, [#allocation7], 64, 64, 4
    $region9: #{conv_classifier_forward.1} parent=1 // pred_fallthru
      _
    // Predicated region
    $region10: #{conv_classifier_forward.1} parent=1 // pred_check
      _
    $region11: #{conv_classifier_forward.1} parent=1 // pred_check_branch
      %32 = sbr.rel (0) target = $region13
    $region12: #{conv_classifier_forward.1} parent=1 // pred_region
      _
    $region13: #{conv_classifier_forward.1} parent=1 // pred_fallthru
      _
    // Predicated region
    $region14: #{conv_classifier_forward.1} parent=1 // pred_check
      _
    $region15: #{conv_classifier_forward.1} parent=1 // pred_check_branch
      %34 = sbr.rel (0) target = $region17
    $region16: #{conv_classifier_forward.1} parent=1 // pred_region
      %s36 = ssub.s32 1152, 1152
      %37 = vsyncadd [#allocation10], %s36
      %s38 = sshll.u32 [#allocation9], 4
      %s39 = int_to_ptr.vmem [resolvable:$true] %s38
      %44 = dma.hbm_to_vmem [thread:$0]  %s3, 1152, %s39, [#allocation10], 128, 128, 8
    $region17: #{conv_classifier_forward.1} parent=1 // pred_fallthru
      _
    // Predicated region
    $region18: #{conv_classifier_forward.1} parent=1 // pred_check
      _
    $region19: #{conv_classifier_forward.1} parent=1 // pred_check_branch
      %46 = sbr.rel (0) target = $region21
    $region20: #{conv_classifier_forward.1} parent=1 // pred_region
      _
    $region21: #{conv_classifier_forward.1} parent=1 // pred_fallthru
      _
    // Predicated region
    $region22: #{conv_classifier_forward.1} parent=1 // pred_check
      _
    $region23: #{conv_classifier_forward.1} parent=1 // pred_check_branch
      %48 = sbr.rel (0) target = $region25
    $region24: #{conv_classifier_forward.1} parent=1 // pred_region
      %s50 = ssub.s32 16, 16
      %51 = vsyncadd [#allocation10], %s50
      %s53 = sshll.u32 [#allocation11], 4
      %s54 = int_to_ptr.vmem [resolvable:$true] %s53
      %56 = dma.hbm_to_vmem [thread:$0]  %s5, 16, %s54, [#allocation10]
    $region25: #{conv_classifier_forward.1} parent=1 // pred_fallthru
      _
    // Predicated region
    $region26: #{conv_classifier_forward.1} parent=1 // pred_check
      _
    $region27: #{conv_classifier_forward.1} parent=1 // pred_check_branch
      %58 = sbr.rel (0) target = $region29
    $region28: #{conv_classifier_forward.1} parent=1 // pred_region
      _
    $region29: #{conv_classifier_forward.1} parent=1 // pred_fallthru
      _
    // Predicated region
    $region30: #{conv_classifier_forward.1} parent=1 // pred_check
      _
    $region31: #{conv_classifier_forward.1} parent=1 // pred_check_branch
      %60 = sbr.rel (0) target = $region33
    $region32: #{conv_classifier_forward.1} parent=1 // pred_region
      %s62 = ssub.s32 16, 16
      %63 = vsyncadd [#allocation13], %s62
      %s65 = sshll.u32 [#allocation12], 4
      %s66 = int_to_ptr.vmem [resolvable:$true] %s65
      %68 = dma.hbm_to_vmem [thread:$0]  %s7, 16, %s66, [#allocation13]
    $region33: #{conv_classifier_forward.1} parent=1 // pred_fallthru
      _
    // Predicated region
    $region34: #{conv_classifier_forward.1} parent=1 // pred_check
      _
    $region35: #{conv_classifier_forward.1} parent=1 // pred_check_branch
      %70 = sbr.rel (0) target = $region37
    $region36: #{conv_classifier_forward.1} parent=1 // pred_region
      %71 = dma.done [#allocation7], 192
    $region37: #{conv_classifier_forward.1} parent=1 // pred_fallthru
      _
    // Predicated region
    $region38: #{conv_classifier_forward.1} parent=1 // pred_check
      _
    $region39: #{conv_classifier_forward.1} parent=1 // pred_check_branch
      %73 = sbr.rel (0) target = $region41
    $region40: #{conv_classifier_forward.1} parent=1 // pred_region
      %74 = dma.done [#allocation10], 1152
    $region41: #{conv_classifier_forward.1} parent=1 // pred_fallthru
      _
    // Predicated region
    $region42: #{conv_classifier_forward.1} parent=1 // pred_check
      _
    $region43: #{conv_classifier_forward.1} parent=1 // pred_check_branch
      %76 = sbr.rel (0) target = $region45
    $region44: #{conv_classifier_forward.1} parent=1 // pred_region
      %77 = dma.done [#allocation10], 16
    $region45: #{conv_classifier_forward.1} parent=1 // pred_fallthru
      _
    // Predicated region
    $region46: #{conv_classifier_forward.1} parent=1 // pred_check
      _
    $region47: #{conv_classifier_forward.1} parent=1 // pred_check_branch
      %79 = sbr.rel (0) target = $region49
    $region48: #{conv_classifier_forward.1} parent=1 // pred_region
      %80 = dma.done [#allocation13], 16
    $region49: #{conv_classifier_forward.1} parent=1 // pred_fallthru
      _
    %v81 = vld [vmem:[%s0] sm:$0xff]
    %v82 = vld [vmem:[%s0 + $0x8] sm:$0xff]
    %v83 = vld [vmem:[%s0 + $0x10] sm:$0xff]
    %v84 = vld [vmem:[%s0 + $0x18] sm:$0xff]
    %v85 = vld [vmem:[%s0 + $0x20] sm:$0xff]
    %v86 = vld [vmem:[%s0 + $0x28] sm:$0xff]
    %v87 = vld [vmem:[%s0 + $0x30] sm:$0xff]
    %v88 = vld [vmem:[%s0 + $0x38] sm:$0xff]
    %vm97 = vcmask 1040384
    %v98 = vrot.slane %v81, 7
    %v99 = vrot.slane %v82, 7
    %v100 = vsel %vm97, %v98, %v99
    %v101 = vrot.slane %v83, 7
    %v102 = vsel %vm97, %v99, %v101
    %v103 = vrot.slane %v84, 7
    %v104 = vsel %vm97, %v101, %v103
    %v105 = vrot.slane %v85, 7
    %v106 = vsel %vm97, %v103, %v105
    %v107 = vrot.slane %v86, 7
    %v108 = vsel %vm97, %v105, %v107
    %v109 = vrot.slane %v87, 7
    %v110 = vsel %vm97, %v107, %v109
    %v111 = vrot.slane %v88, 7
    %v112 = vsel %vm97, %v109, %v111
    %v121 = vsel %vm97, 0.0, %v98
    %vm122 = vcmask 1046528
    %v123 = vrot.slane %v81, 1
    %v124 = vrot.slane %v82, 1
    %v125 = vsel %vm122, %v123, %v124
    %v126 = vrot.slane %v83, 1
    %v127 = vsel %vm122, %v124, %v126
    %v128 = vrot.slane %v84, 1
    %v129 = vsel %vm122, %v126, %v128
    %v130 = vrot.slane %v85, 1
    %v131 = vsel %vm122, %v128, %v130
    %v132 = vrot.slane %v86, 1
    %v133 = vsel %vm122, %v130, %v132
    %v134 = vrot.slane %v87, 1
    %v135 = vsel %vm122, %v132, %v134
    %v136 = vrot.slane %v88, 1
    %v137 = vsel %vm122, %v134, %v136
    %v146 = vsel %vm122, %v136, 0.0
    %v147 = vlaneseq
    %v148 = vshrl.u32 %v147, 7
    %v149 = vadd.s32 %v148, 8
    %v150 = vadd.s32 %v148, 16
    %v151 = vadd.s32 %v148, 24
    %v152 = vadd.s32 %v148, 32
    %v153 = vadd.s32 %v148, 40
    %v154 = vadd.s32 %v148, 48
    %v155 = vadd.s32 %v148, 56
    %vm156 = vcmp.lt.s32.totalorder %v148, 0
    %v157 = vsub.s32 0, %v148
    %v158 = vsel %vm156, %v157, %v148
    %v159 = vshrl.u32 %v158, 5
    %v160 = vand.u32 %v158, 31
    %v161 = vsub.s32 0, %v160
    %v162 = vsel %vm156, %v161, %v160
    %vm163 = vcmp.lt.s32.totalorder %v149, 0
    %v164 = vsub.s32 0, %v149
    %v165 = vsel %vm163, %v164, %v149
    %v166 = vshrl.u32 %v165, 5
    %v167 = vand.u32 %v165, 31
    %v168 = vsub.s32 0, %v167
    %v169 = vsel %vm163, %v168, %v167
    %vm170 = vcmp.lt.s32.totalorder %v150, 0
    %v171 = vsub.s32 0, %v150
    %v172 = vsel %vm170, %v171, %v150
    %v173 = vshrl.u32 %v172, 5
    %v174 = vand.u32 %v172, 31
    %v175 = vsub.s32 0, %v174
    %v176 = vsel %vm170, %v175, %v174
    %vm177 = vcmp.lt.s32.totalorder %v151, 0
    %v178 = vsub.s32 0, %v151
    %v179 = vsel %vm177, %v178, %v151
    %v180 = vshrl.u32 %v179, 5
    %v181 = vand.u32 %v179, 31
    %v182 = vsub.s32 0, %v181
    %v183 = vsel %vm177, %v182, %v181
    %vm184 = vcmp.lt.s32.totalorder %v152, 0
    %v185 = vsub.s32 0, %v152
    %v186 = vsel %vm184, %v185, %v152
    %v187 = vshrl.u32 %v186, 5
    %v188 = vand.u32 %v186, 31
    %v189 = vsub.s32 0, %v188
    %v190 = vsel %vm184, %v189, %v188
    %vm191 = vcmp.lt.s32.totalorder %v153, 0
    %v192 = vsub.s32 0, %v153
    %v193 = vsel %vm191, %v192, %v153
    %v194 = vshrl.u32 %v193, 5
    %v195 = vand.u32 %v193, 31
    %v196 = vsub.s32 0, %v195
    %v197 = vsel %vm191, %v196, %v195
    %vm198 = vcmp.lt.s32.totalorder %v154, 0
    %v199 = vsub.s32 0, %v154
    %v200 = vsel %vm198, %v199, %v154
    %v201 = vshrl.u32 %v200, 5
    %v202 = vand.u32 %v200, 31
    %v203 = vsub.s32 0, %v202
    %v204 = vsel %vm198, %v203, %v202
    %vm205 = vcmp.lt.s32.totalorder %v155, 0
    %v206 = vsub.s32 0, %v155
    %v207 = vsel %vm205, %v206, %v155
    %v208 = vshrl.u32 %v207, 5
    %v209 = vand.u32 %v207, 31
    %v210 = vsub.s32 0, %v209
    %v211 = vsel %vm205, %v210, %v209
    %vm212 = vcmp.ne.s32.totalorder %v162, 0
    %vm213 = vcmp.ne.s32.totalorder %v169, 0
    %vm214 = vcmp.ne.s32.totalorder %v176, 0
    %vm215 = vcmp.ne.s32.totalorder %v183, 0
    %vm216 = vcmp.ne.s32.totalorder %v190, 0
    %vm217 = vcmp.ne.s32.totalorder %v197, 0
    %vm218 = vcmp.ne.s32.totalorder %v204, 0
    %vm219 = vcmp.ne.s32.totalorder %v211, 0
    %vm220 = vcmp.lt.s32.totalorder %v162, 0
    %vm221 = vcmp.lt.s32.totalorder %v169, 0
    %vm222 = vcmp.lt.s32.totalorder %v176, 0
    %vm223 = vcmp.lt.s32.totalorder %v183, 0
    %vm224 = vcmp.lt.s32.totalorder %v190, 0
    %vm225 = vcmp.lt.s32.totalorder %v197, 0
    %vm226 = vcmp.lt.s32.totalorder %v204, 0
    %vm227 = vcmp.lt.s32.totalorder %v211, 0
    %vm228 = vmand %vm220, %vm212
    %vm229 = vmand %vm221, %vm213
    %vm230 = vmand %vm222, %vm214
    %vm231 = vmand %vm223, %vm215
    %vm232 = vmand %vm224, %vm216
    %vm233 = vmand %vm225, %vm217
    %vm234 = vmand %vm226, %vm218
    %vm235 = vmand %vm227, %vm219
    %v236 = vadd.s32 %v162, 32
    %v237 = vadd.s32 %v169, 32
    %v238 = vadd.s32 %v176, 32
    %v239 = vadd.s32 %v183, 32
    %v240 = vadd.s32 %v190, 32
    %v241 = vadd.s32 %v197, 32
    %v242 = vadd.s32 %v204, 32
    %v243 = vadd.s32 %v211, 32
    %v244 = vsel %vm228, %v236, %v162
    %v245 = vsel %vm229, %v237, %v169
    %v246 = vsel %vm230, %v238, %v176
    %v247 = vsel %vm231, %v239, %v183
    %v248 = vsel %vm232, %v240, %v190
    %v249 = vsel %vm233, %v241, %v197
    %v250 = vsel %vm234, %v242, %v204
    %v251 = vsel %vm235, %v243, %v211
    %vm252 = vcmp.eq.s32.totalorder %v244, 0
    %vm253 = vcmp.eq.s32.totalorder %v245, 0
    %vm254 = vcmp.eq.s32.totalorder %v246, 0
    %vm255 = vcmp.eq.s32.totalorder %v247, 0
    %vm256 = vcmp.eq.s32.totalorder %v248, 0
    %vm257 = vcmp.eq.s32.totalorder %v249, 0
    %vm258 = vcmp.eq.s32.totalorder %v250, 0
    %vm259 = vcmp.eq.s32.totalorder %v251, 0
    %v260 = vsel %vm252, 1, 0
    %v261 = vsel %vm253, 1, 0
    %v262 = vsel %vm254, 1, 0
    %v263 = vsel %vm255, 1, 0
    %v264 = vsel %vm256, 1, 0
    %v265 = vsel %vm257, 1, 0
    %v266 = vsel %vm258, 1, 0
    %v267 = vsel %vm259, 1, 0
    %vm268 = vcmp.eq.s32.totalorder %v260, 1
    %vm269 = vcmp.eq.s32.totalorder %v261, 1
    %vm270 = vcmp.eq.s32.totalorder %v262, 1
    %vm271 = vcmp.eq.s32.totalorder %v263, 1
    %vm272 = vcmp.eq.s32.totalorder %v264, 1
    %vm273 = vcmp.eq.s32.totalorder %v265, 1
    %vm274 = vcmp.eq.s32.totalorder %v266, 1
    %vm275 = vcmp.eq.s32.totalorder %v267, 1
    %v276 = vsel %vm268, 0.0, %v121
    %v277 = vsel %vm269, 0.0, %v100
    %v278 = vsel %vm270, 0.0, %v102
    %v279 = vsel %vm271, 0.0, %v104
    %v280 = vsel %vm272, 0.0, %v106
    %v281 = vsel %vm273, 0.0, %v108
    %v282 = vsel %vm274, 0.0, %v110
    %v283 = vsel %vm275, 0.0, %v112
    %vm284 = vcmp.eq.s32.totalorder %v244, 31
    %vm285 = vcmp.eq.s32.totalorder %v245, 31
    %vm286 = vcmp.eq.s32.totalorder %v246, 31
    %vm287 = vcmp.eq.s32.totalorder %v247, 31
    %vm288 = vcmp.eq.s32.totalorder %v248, 31
    %vm289 = vcmp.eq.s32.totalorder %v249, 31
    %vm290 = vcmp.eq.s32.totalorder %v250, 31
    %vm291 = vcmp.eq.s32.totalorder %v251, 31
    %v292 = vsel %vm284, 1, 0
    %v293 = vsel %vm285, 1, 0
    %v294 = vsel %vm286, 1, 0
    %v295 = vsel %vm287, 1, 0
    %v296 = vsel %vm288, 1, 0
    %v297 = vsel %vm289, 1, 0
    %v298 = vsel %vm290, 1, 0
    %v299 = vsel %vm291, 1, 0
    %vm300 = vcmp.eq.s32.totalorder %v292, 1
    %vm301 = vcmp.eq.s32.totalorder %v293, 1
    %vm302 = vcmp.eq.s32.totalorder %v294, 1
    %vm303 = vcmp.eq.s32.totalorder %v295, 1
    %vm304 = vcmp.eq.s32.totalorder %v296, 1
    %vm305 = vcmp.eq.s32.totalorder %v297, 1
    %vm306 = vcmp.eq.s32.totalorder %v298, 1
    %vm307 = vcmp.eq.s32.totalorder %v299, 1
    %v308 = vsel %vm300, 0.0, %v125
    %v309 = vsel %vm301, 0.0, %v127
    %v310 = vsel %vm302, 0.0, %v129
    %v311 = vsel %vm303, 0.0, %v131
    %v312 = vsel %vm304, 0.0, %v133
    %v313 = vsel %vm305, 0.0, %v135
    %v314 = vsel %vm306, 0.0, %v137
    %v315 = vsel %vm307, 0.0, %v146
    %v316 = vld [vmem:[#allocation6] sm:$0xf]
    %s317 = scalar_lea.vmem [#allocation6], 4
    %v318 = vld [vmem:[%s317] sm:$0xf]
    %vm319 = vcmask 31744
    %v320 = vsel %vm319, %v81, 0
    %v322 = vsel %vm319, %v82, 0
    %v324 = vsel %vm319, %v83, 0
    %v326 = vsel %vm319, %v84, 0
    %v328 = vsel %vm319, %v85, 0
    %v330 = vsel %vm319, %v86, 0
    %v332 = vsel %vm319, %v87, 0
    %v334 = vsel %vm319, %v88, 0
    %vm336 = vcmask 1043456
    %v338 = vsel %vm336, %v318, 0
    %340 = vmatprep.subr.mxu0 0.0
    %341 = vmatpush1.msra.mxu0 %v338
    %342 = vmatprep.subr.mxu0 0.0
    %343 = vmatpush1.msra.mxu0 0.0
    %344 = vmatprep.subr.mxu0 0.0
    %345 = vmatpush1.msra.mxu0 0.0
    %346 = vmatprep.subr.mxu0 0.0
    %347 = vmatpush1.msra.mxu0 0.0
    %348 = vmatprep.subr.mxu0 0.0
    %349 = vmatpush1.msra.mxu0 0.0
    %350 = vmatprep.subr.mxu0 0.0
    %351 = vmatpush1.msra.mxu0 0.0
    %352 = vmatprep.subr.mxu0 0.0
    %353 = vmatpush1.msra.mxu0 0.0
    %354 = vmatprep.subr.mxu0 0.0
    %355 = vmatpush1.msra.mxu0 0.0
    %356 = vmatprep.subr.mxu0 0.0
    %357 = vmatpush1.msra.mxu0 0.0
    %358 = vmatprep.subr.mxu0 0.0
    %359 = vmatpush1.msra.mxu0 0.0
    %360 = vmatprep.subr.mxu0 0.0
    %361 = vmatpush1.msra.mxu0 0.0
    %362 = vmatprep.subr.mxu0 0.0
    %363 = vmatpush1.msra.mxu0 0.0
    %364 = vmatprep.subr.mxu0 0.0
    %365 = vmatpush1.msra.mxu0 0.0
    %366 = vmatprep.subr.mxu0 0.0
    %367 = vmatpush1.msra.mxu0 0.0
    %368 = vmatprep.subr.mxu0 0.0
    %369 = vmatpush1.msra.mxu0 0.0
    %370 = vmatprep.subr.mxu0 0.0
    %371 = vmatpush1.msra.mxu0 0.0
    %372 = vmatprep.subr.mxu0 0.0
    %373 = vmatpush1.msra.mxu0 0.0
    %374 = vmatprep.subr.mxu0 0.0
    %375 = vmatpush1.msra.mxu0 0.0
    %376 = vmatprep.subr.mxu0 0.0
    %377 = vmatpush1.msra.mxu0 0.0
    %378 = vmatprep.subr.mxu0 0.0
    %379 = vmatpush1.msra.mxu0 0.0
    %380 = vmatprep.subr.mxu0 0.0
    %381 = vmatpush1.msra.mxu0 0.0
    %382 = vmatprep.subr.mxu0 0.0
    %383 = vmatpush1.msra.mxu0 0.0
    %384 = vmatprep.subr.mxu0 0.0
    %385 = vmatpush1.msra.mxu0 0.0
    %386 = vmatprep.subr.mxu0 0.0
    %387 = vmatpush1.msra.mxu0 0.0
    %388 = vmatprep.subr.mxu0 0.0
    %389 = vmatpush1.msra.mxu0 0.0
    %390 = vmatprep.subr.mxu0 0.0
    %391 = vmatpush1.msra.mxu0 0.0
    %392 = vmatprep.subr.mxu0 0.0
    %393 = vmatpush1.msra.mxu0 0.0
    %394 = vmatprep.subr.mxu0 0.0
    %395 = vmatpush1.msra.mxu0 0.0
    %396 = vmatprep.subr.mxu0 0.0
    %397 = vmatpush1.msra.mxu0 0.0
    %398 = vmatprep.subr.mxu0 0.0
    %399 = vmatpush1.msra.mxu0 0.0
    %400 = vmatprep.subr.mxu0 0.0
    %401 = vmatpush1.msra.mxu0 0.0
    %402 = vmatprep.subr.mxu0 0.0
    %403 = vmatpush1.msra.mxu0 0.0
    %404 = vmatprep.mubr.f32.mxu0 0.0
    %405 = vmatmul.mubr.f32.gmra.mrb[0].mxu0 %v320
    %v406 = vpop.f32.mrb[0].mxu0
    %v407 = vadd.f32 0.0, %v406
    %v408 = vpop.f32.mrb[0].mxu0
    %409 = vmatprep.mubr.f32.mxu0 0.0
    %410 = vmatmul.mubr.f32.gmra.mrb[0].mxu0 %v322
    %v411 = vpop.f32.mrb[0].mxu0
    %v412 = vadd.f32 0.0, %v411
    %v413 = vpop.f32.mrb[0].mxu0
    %414 = vmatprep.mubr.f32.mxu0 0.0
    %415 = vmatmul.mubr.f32.gmra.mrb[0].mxu0 %v324
    %v416 = vpop.f32.mrb[0].mxu0
    %v417 = vadd.f32 0.0, %v416
    %v418 = vpop.f32.mrb[0].mxu0
    %419 = vmatprep.mubr.f32.mxu0 0.0
    %420 = vmatmul.mubr.f32.gmra.mrb[0].mxu0 %v326
    %v421 = vpop.f32.mrb[0].mxu0
    %v422 = vadd.f32 0.0, %v421
    %v423 = vpop.f32.mrb[0].mxu0
    %424 = vmatprep.mubr.f32.mxu0 0.0
    %425 = vmatmul.mubr.f32.gmra.mrb[0].mxu0 %v328
    %v426 = vpop.f32.mrb[0].mxu0
    %v427 = vadd.f32 0.0, %v426
    %v428 = vpop.f32.mrb[0].mxu0
    %429 = vmatprep.mubr.f32.mxu0 0.0
    %430 = vmatmul.mubr.f32.gmra.mrb[0].mxu0 %v330
    %v431 = vpop.f32.mrb[0].mxu0
    %v432 = vadd.f32 0.0, %v431
    %v433 = vpop.f32.mrb[0].mxu0
    %434 = vmatprep.mubr.f32.mxu0 0.0
    %435 = vmatmul.mubr.f32.gmra.mrb[0].mxu0 %v332
    %v436 = vpop.f32.mrb[0].mxu0
    %v437 = vadd.f32 0.0, %v436
    %v438 = vpop.f32.mrb[0].mxu0
    %439 = vmatprep.mubr.f32.mxu0 0.0
    %440 = vmatmul.mubr.f32.gmra.mrb[0].mxu0 %v334
    %v441 = vpop.f32.mrb[0].mxu0
    %v442 = vadd.f32 0.0, %v441
    %v443 = vpop.f32.mrb[0].mxu0
    %444 = vdwg.mxu0
    %v446 = vsel %vm319, %v276, 0
    %v449 = vsel %vm319, %v277, 0
    %v452 = vsel %vm319, %v278, 0
    %v455 = vsel %vm319, %v279, 0
    %v458 = vsel %vm319, %v280, 0
    %v461 = vsel %vm319, %v281, 0
    %v464 = vsel %vm319, %v282, 0
    %v467 = vsel %vm319, %v283, 0
    %v470 = vsel %vm336, %v316, 0
    %472 = vmatprep.subr.mxu0 0.0
    %473 = vmatpush1.msra.mxu0 %v470
    %474 = vmatprep.subr.mxu0 0.0
    %475 = vmatpush1.msra.mxu0 0.0
    %476 = vmatprep.subr.mxu0 0.0
    %477 = vmatpush1.msra.mxu0 0.0
    %478 = vmatprep.subr.mxu0 0.0
    %479 = vmatpush1.msra.mxu0 0.0
    %480 = vmatprep.subr.mxu0 0.0
    %481 = vmatpush1.msra.mxu0 0.0
    %482 = vmatprep.subr.mxu0 0.0
    %483 = vmatpush1.msra.mxu0 0.0
    %484 = vmatprep.subr.mxu0 0.0
    %485 = vmatpush1.msra.mxu0 0.0
    %486 = vmatprep.subr.mxu0 0.0
    %487 = vmatpush1.msra.mxu0 0.0
    %488 = vmatprep.subr.mxu0 0.0
    %489 = vmatpush1.msra.mxu0 0.0
    %490 = vmatprep.subr.mxu0 0.0
    %491 = vmatpush1.msra.mxu0 0.0
    %492 = vmatprep.subr.mxu0 0.0
    %493 = vmatpush1.msra.mxu0 0.0
    %494 = vmatprep.subr.mxu0 0.0
    %495 = vmatpush1.msra.mxu0 0.0
    %496 = vmatprep.subr.mxu0 0.0
    %497 = vmatpush1.msra.mxu0 0.0
    %498 = vmatprep.subr.mxu0 0.0
    %499 = vmatpush1.msra.mxu0 0.0
    %500 = vmatprep.subr.mxu0 0.0
    %501 = vmatpush1.msra.mxu0 0.0
    %502 = vmatprep.subr.mxu0 0.0
    %503 = vmatpush1.msra.mxu0 0.0
    %504 = vmatprep.subr.mxu0 0.0
    %505 = vmatpush1.msra.mxu0 0.0
    %506 = vmatprep.subr.mxu0 0.0
    %507 = vmatpush1.msra.mxu0 0.0
    %508 = vmatprep.subr.mxu0 0.0
    %509 = vmatpush1.msra.mxu0 0.0
    %510 = vmatprep.subr.mxu0 0.0
    %511 = vmatpush1.msra.mxu0 0.0
    %512 = vmatprep.subr.mxu0 0.0
    %513 = vmatpush1.msra.mxu0 0.0
    %514 = vmatprep.subr.mxu0 0.0
    %515 = vmatpush1.msra.mxu0 0.0
    %516 = vmatprep.subr.mxu0 0.0
    %517 = vmatpush1.msra.mxu0 0.0
    %518 = vmatprep.subr.mxu0 0.0
    %519 = vmatpush1.msra.mxu0 0.0
    %520 = vmatprep.subr.mxu0 0.0
    %521 = vmatpush1.msra.mxu0 0.0
    %522 = vmatprep.subr.mxu0 0.0
    %523 = vmatpush1.msra.mxu0 0.0
    %524 = vmatprep.subr.mxu0 0.0
    %525 = vmatpush1.msra.mxu0 0.0
    %526 = vmatprep.subr.mxu0 0.0
    %527 = vmatpush1.msra.mxu0 0.0
    %528 = vmatprep.subr.mxu0 0.0
    %529 = vmatpush1.msra.mxu0 0.0
    %530 = vmatprep.subr.mxu0 0.0
    %531 = vmatpush1.msra.mxu0 0.0
    %532 = vmatprep.subr.mxu0 0.0
    %533 = vmatpush1.msra.mxu0 0.0
    %534 = vmatprep.subr.mxu0 0.0
    %535 = vmatpush1.msra.mxu0 0.0
    %536 = vmatprep.mubr.f32.mxu0 0.0
    %537 = vmatmul.mubr.f32.gmra.mrb[0].mxu0 %v446
    %v538 = vpop.f32.mrb[0].mxu0
    %v539 = vadd.f32 %v407, %v538
    %v540 = vpop.f32.mrb[0].mxu0
    %541 = vmatprep.mubr.f32.mxu0 0.0
    %542 = vmatmul.mubr.f32.gmra.mrb[0].mxu0 %v449
    %v543 = vpop.f32.mrb[0].mxu0
    %v544 = vadd.f32 %v412, %v543
    %v545 = vpop.f32.mrb[0].mxu0
    %546 = vmatprep.mubr.f32.mxu0 0.0
    %547 = vmatmul.mubr.f32.gmra.mrb[0].mxu0 %v452
    %v548 = vpop.f32.mrb[0].mxu0
    %v549 = vadd.f32 %v417, %v548
    %v550 = vpop.f32.mrb[0].mxu0
    %551 = vmatprep.mubr.f32.mxu0 0.0
    %552 = vmatmul.mubr.f32.gmra.mrb[0].mxu0 %v455
    %v553 = vpop.f32.mrb[0].mxu0
    %v554 = vadd.f32 %v422, %v553
    %v555 = vpop.f32.mrb[0].mxu0
    %556 = vmatprep.mubr.f32.mxu0 0.0
    %557 = vmatmul.mubr.f32.gmra.mrb[0].mxu0 %v458
    %v558 = vpop.f32.mrb[0].mxu0
    %v559 = vadd.f32 %v427, %v558
    %v560 = vpop.f32.mrb[0].mxu0
    %561 = vmatprep.mubr.f32.mxu0 0.0
    %562 = vmatmul.mubr.f32.gmra.mrb[0].mxu0 %v461
    %v563 = vpop.f32.mrb[0].mxu0
    %v564 = vadd.f32 %v432, %v563
    %v565 = vpop.f32.mrb[0].mxu0
    %566 = vmatprep.mubr.f32.mxu0 0.0
    %567 = vmatmul.mubr.f32.gmra.mrb[0].mxu0 %v464
    %v568 = vpop.f32.mrb[0].mxu0
    %v569 = vadd.f32 %v437, %v568
    %v570 = vpop.f32.mrb[0].mxu0
    %571 = vmatprep.mubr.f32.mxu0 0.0
    %572 = vmatmul.mubr.f32.gmra.mrb[0].mxu0 %v467
    %v573 = vpop.f32.mrb[0].mxu0
    %v574 = vadd.f32 %v442, %v573
    %v575 = vpop.f32.mrb[0].mxu0
    %576 = vdwg.mxu0
    %s577 = scalar_lea.vmem [#allocation6], 8
    %v578 = vld [vmem:[%s577] sm:$0xf]
    %v580 = vsel %vm319, %v308, 0
    %v583 = vsel %vm319, %v309, 0
    %v586 = vsel %vm319, %v310, 0
    %v589 = vsel %vm319, %v311, 0
    %v592 = vsel %vm319, %v312, 0
    %v595 = vsel %vm319, %v313, 0
    %v598 = vsel %vm319, %v314, 0
    %v601 = vsel %vm319, %v315, 0
    %v604 = vsel %vm336, %v578, 0
    %606 = vmatprep.subr.mxu0 0.0
    %607 = vmatpush1.msra.mxu0 %v604
    %608 = vmatprep.subr.mxu0 0.0
    %609 = vmatpush1.msra.mxu0 0.0
    %610 = vmatprep.subr.mxu0 0.0
    %611 = vmatpush1.msra.mxu0 0.0
    %612 = vmatprep.subr.mxu0 0.0
    %613 = vmatpush1.msra.mxu0 0.0
    %614 = vmatprep.subr.mxu0 0.0
    %615 = vmatpush1.msra.mxu0 0.0
    %616 = vmatprep.subr.mxu0 0.0
    %617 = vmatpush1.msra.mxu0 0.0
    %618 = vmatprep.subr.mxu0 0.0
    %619 = vmatpush1.msra.mxu0 0.0
    %620 = vmatprep.subr.mxu0 0.0
    %621 = vmatpush1.msra.mxu0 0.0
    %622 = vmatprep.subr.mxu0 0.0
    %623 = vmatpush1.msra.mxu0 0.0
    %624 = vmatprep.subr.mxu0 0.0
    %625 = vmatpush1.msra.mxu0 0.0
    %626 = vmatprep.subr.mxu0 0.0
    %627 = vmatpush1.msra.mxu0 0.0
    %628 = vmatprep.subr.mxu0 0.0
    %629 = vmatpush1.msra.mxu0 0.0
    %630 = vmatprep.subr.mxu0 0.0
    %631 = vmatpush1.msra.mxu0 0.0
    %632 = vmatprep.subr.mxu0 0.0
    %633 = vmatpush1.msra.mxu0 0.0
    %634 = vmatprep.subr.mxu0 0.0
    %635 = vmatpush1.msra.mxu0 0.0
    %636 = vmatprep.subr.mxu0 0.0
    %637 = vmatpush1.msra.mxu0 0.0
    %638 = vmatprep.subr.mxu0 0.0
    %639 = vmatpush1.msra.mxu0 0.0
    %640 = vmatprep.subr.mxu0 0.0
    %641 = vmatpush1.msra.mxu0 0.0
    %642 = vmatprep.subr.mxu0 0.0
    %643 = vmatpush1.msra.mxu0 0.0
    %644 = vmatprep.subr.mxu0 0.0
    %645 = vmatpush1.msra.mxu0 0.0
    %646 = vmatprep.subr.mxu0 0.0
    %647 = vmatpush1.msra.mxu0 0.0
    %648 = vmatprep.subr.mxu0 0.0
    %649 = vmatpush1.msra.mxu0 0.0
    %650 = vmatprep.subr.mxu0 0.0
    %651 = vmatpush1.msra.mxu0 0.0
    %652 = vmatprep.subr.mxu0 0.0
    %653 = vmatpush1.msra.mxu0 0.0
    %654 = vmatprep.subr.mxu0 0.0
    %655 = vmatpush1.msra.mxu0 0.0
    %656 = vmatprep.subr.mxu0 0.0
    %657 = vmatpush1.msra.mxu0 0.0
    %658 = vmatprep.subr.mxu0 0.0
    %659 = vmatpush1.msra.mxu0 0.0
    %660 = vmatprep.subr.mxu0 0.0
    %661 = vmatpush1.msra.mxu0 0.0
    %662 = vmatprep.subr.mxu0 0.0
    %663 = vmatpush1.msra.mxu0 0.0
    %664 = vmatprep.subr.mxu0 0.0
    %665 = vmatpush1.msra.mxu0 0.0
    %666 = vmatprep.subr.mxu0 0.0
    %667 = vmatpush1.msra.mxu0 0.0
    %668 = vmatprep.subr.mxu0 0.0
    %669 = vmatpush1.msra.mxu0 0.0
    %670 = vmatprep.mubr.f32.mxu0 0.0
    %671 = vmatmul.mubr.f32.gmra.mrb[0].mxu0 %v580
    %v672 = vpop.f32.mrb[0].mxu0
    %v673 = vadd.f32 0.0, %v672
    %v674 = vpop.f32.mrb[0].mxu0
    %675 = vmatprep.mubr.f32.mxu0 0.0
    %676 = vmatmul.mubr.f32.gmra.mrb[0].mxu0 %v583
    %v677 = vpop.f32.mrb[0].mxu0
    %v678 = vadd.f32 0.0, %v677
    %v679 = vpop.f32.mrb[0].mxu0
    %680 = vmatprep.mubr.f32.mxu0 0.0
    %681 = vmatmul.mubr.f32.gmra.mrb[0].mxu0 %v586
    %v682 = vpop.f32.mrb[0].mxu0
    %v683 = vadd.f32 0.0, %v682
    %v684 = vpop.f32.mrb[0].mxu0
    %685 = vmatprep.mubr.f32.mxu0 0.0
    %686 = vmatmul.mubr.f32.gmra.mrb[0].mxu0 %v589
    %v687 = vpop.f32.mrb[0].mxu0
    %v688 = vadd.f32 0.0, %v687
    %v689 = vpop.f32.mrb[0].mxu0
    %690 = vmatprep.mubr.f32.mxu0 0.0
    %691 = vmatmul.mubr.f32.gmra.mrb[0].mxu0 %v592
    %v692 = vpop.f32.mrb[0].mxu0
    %v693 = vadd.f32 0.0, %v692
    %v694 = vpop.f32.mrb[0].mxu0
    %695 = vmatprep.mubr.f32.mxu0 0.0
    %696 = vmatmul.mubr.f32.gmra.mrb[0].mxu0 %v595
    %v697 = vpop.f32.mrb[0].mxu0
    %v698 = vadd.f32 0.0, %v697
    %v699 = vpop.f32.mrb[0].mxu0
    %700 = vmatprep.mubr.f32.mxu0 0.0
    %701 = vmatmul.mubr.f32.gmra.mrb[0].mxu0 %v598
    %v702 = vpop.f32.mrb[0].mxu0
    %v703 = vadd.f32 0.0, %v702
    %v704 = vpop.f32.mrb[0].mxu0
    %705 = vmatprep.mubr.f32.mxu0 0.0
    %706 = vmatmul.mubr.f32.gmra.mrb[0].mxu0 %v601
    %v707 = vpop.f32.mrb[0].mxu0
    %v708 = vadd.f32 0.0, %v707
    %v709 = vpop.f32.mrb[0].mxu0
    %710 = vdwg.mxu0
    %v711 = vadd.f32 %v539, %v673
    %v712 = vadd.f32 %v544, %v678
    %v713 = vadd.f32 %v549, %v683
    %v714 = vadd.f32 %v554, %v688
    %v715 = vadd.f32 %v559, %v693
    %v716 = vadd.f32 %v564, %v698
    %v717 = vadd.f32 %v569, %v703
    %v718 = vadd.f32 %v574, %v708
    %vm719 = vcmp.gt.f32.partialorder %v711, 0.0
    %vm720 = vcmp.gt.f32.partialorder %v712, 0.0
    %vm721 = vcmp.gt.f32.partialorder %v713, 0.0
    %vm722 = vcmp.gt.f32.partialorder %v714, 0.0
    %vm723 = vcmp.gt.f32.partialorder %v715, 0.0
    %vm724 = vcmp.gt.f32.partialorder %v716, 0.0
    %vm725 = vcmp.gt.f32.partialorder %v717, 0.0
    %vm726 = vcmp.gt.f32.partialorder %v718, 0.0
    %v727 = vmul.f32 %v711, 0.05
    %v728 = vmul.f32 %v712, 0.05
    %v729 = vmul.f32 %v713, 0.05
    %v730 = vmul.f32 %v714, 0.05
    %v731 = vmul.f32 %v715, 0.05
    %v732 = vmul.f32 %v716, 0.05
    %v733 = vmul.f32 %v717, 0.05
    %v734 = vmul.f32 %v718, 0.05
    %v735 = vsel %vm719, %v711, %v727
    %v736 = vsel %vm720, %v712, %v728
    %v737 = vsel %vm721, %v713, %v729
    %v738 = vsel %vm722, %v714, %v730
    %v739 = vsel %vm723, %v715, %v731
    %v740 = vsel %vm724, %v716, %v732
    %v741 = vsel %vm725, %v717, %v733
    %v742 = vsel %vm726, %v718, %v734
    %vm743 = vcmask 130048
    %744 = vst.msk [vmem:[#allocation2] sm:$0xff] %vm743, %v735
    %745 = vst.msk [vmem:[#allocation2 + $0x8] sm:$0xff] %vm743, %v736
    %746 = vst.msk [vmem:[#allocation2 + $0x10] sm:$0xff] %vm743, %v737
    %747 = vst.msk [vmem:[#allocation2 + $0x18] sm:$0xff] %vm743, %v738
    %748 = vst.msk [vmem:[#allocation2 + $0x20] sm:$0xff] %vm743, %v739
    %749 = vst.msk [vmem:[#allocation2 + $0x28] sm:$0xff] %vm743, %v740
    %750 = vst.msk [vmem:[#allocation2 + $0x30] sm:$0xff] %vm743, %v741
    %751 = vst.msk [vmem:[#allocation2 + $0x38] sm:$0xff] %vm743, %v742
    %v752 = vld [vmem:[#allocation2] ss:$2 sm:$0xff]
    %s753 = scalar_lea.vmem [#allocation2], 16
    %v754 = vld [vmem:[%s753] ss:$2 sm:$0xff]
    %s755 = scalar_lea.vmem [#allocation2], 32
    %v756 = vld [vmem:[%s755] ss:$2 sm:$0xff]
    %s757 = scalar_lea.vmem [#allocation2], 48
    %v758 = vld [vmem:[%s757] ss:$2 sm:$0xff]
    %s759 = scalar_lea.vmem [#allocation2], 1
    %v760 = vld [vmem:[%s759] ss:$2 sm:$0xff]
    %s761 = scalar_lea.vmem [#allocation2], 17
    %v762 = vld [vmem:[%s761] ss:$2 sm:$0xff]
    %s763 = scalar_lea.vmem [#allocation2], 33
    %v764 = vld [vmem:[%s763] ss:$2 sm:$0xff]
    %s765 = scalar_lea.vmem [#allocation2], 49
    %v766 = vld [vmem:[%s765] ss:$2 sm:$0xff]
    %v767 = vadd.f32 %v752, %v760
    %v768 = vadd.f32 %v754, %v762
    %v769 = vadd.f32 %v756, %v764
    %v770 = vadd.f32 %v758, %v766
    %v771 = vmul.f32 %v767, 0.5
    %v772 = vmul.f32 %v768, 0.5
    %v773 = vmul.f32 %v769, 0.5
    %v774 = vmul.f32 %v770, 0.5
    %v779 = vrot.slane %v771, 7
    %v780 = vrot.slane %v772, 7
    %v781 = vsel %vm97, %v779, %v780
    %v782 = vrot.slane %v773, 7
    %v783 = vsel %vm97, %v780, %v782
    %v784 = vrot.slane %v774, 7
    %v785 = vsel %vm97, %v782, %v784
    %v790 = vsel %vm97, 0.0, %v779
    %v791 = vrot.slane %v771, 1
    %v792 = vrot.slane %v772, 1
    %v793 = vsel %vm122, %v791, %v792
    %v794 = vrot.slane %v773, 1
    %v795 = vsel %vm122, %v792, %v794
    %v796 = vrot.slane %v774, 1
    %v797 = vsel %vm122, %v794, %v796
    %v802 = vsel %vm122, %v796, 0.0
    %vm803 = vcmp.lt.s32.totalorder %v148, 0
    %v804 = vsub.s32 0, %v148
    %v805 = vsel %vm803, %v804, %v148
    %v806 = vshrl.u32 %v805, 4
    %v807 = vand.u32 %v805, 15
    %v808 = vsub.s32 0, %v807
    %v809 = vsel %vm803, %v808, %v807
    %vm810 = vcmp.lt.s32.totalorder %v149, 0
    %v811 = vsub.s32 0, %v149
    %v812 = vsel %vm810, %v811, %v149
    %v813 = vshrl.u32 %v812, 4
    %v814 = vand.u32 %v812, 15
    %v815 = vsub.s32 0, %v814
    %v816 = vsel %vm810, %v815, %v814
    %vm817 = vcmp.lt.s32.totalorder %v150, 0
    %v818 = vsub.s32 0, %v150
    %v819 = vsel %vm817, %v818, %v150
    %v820 = vshrl.u32 %v819, 4
    %v821 = vand.u32 %v819, 15
    %v822 = vsub.s32 0, %v821
    %v823 = vsel %vm817, %v822, %v821
    %vm824 = vcmp.lt.s32.totalorder %v151, 0
    %v825 = vsub.s32 0, %v151
    %v826 = vsel %vm824, %v825, %v151
    %v827 = vshrl.u32 %v826, 4
    %v828 = vand.u32 %v826, 15
    %v829 = vsub.s32 0, %v828
    %v830 = vsel %vm824, %v829, %v828
    %vm831 = vcmp.ne.s32.totalorder %v809, 0
    %vm832 = vcmp.ne.s32.totalorder %v816, 0
    %vm833 = vcmp.ne.s32.totalorder %v823, 0
    %vm834 = vcmp.ne.s32.totalorder %v830, 0
    %vm835 = vcmp.lt.s32.totalorder %v809, 0
    %vm836 = vcmp.lt.s32.totalorder %v816, 0
    %vm837 = vcmp.lt.s32.totalorder %v823, 0
    %vm838 = vcmp.lt.s32.totalorder %v830, 0
    %vm839 = vmand %vm835, %vm831
    %vm840 = vmand %vm836, %vm832
    %vm841 = vmand %vm837, %vm833
    %vm842 = vmand %vm838, %vm834
    %v843 = vadd.s32 %v809, 16
    %v844 = vadd.s32 %v816, 16
    %v845 = vadd.s32 %v823, 16
    %v846 = vadd.s32 %v830, 16
    %v847 = vsel %vm839, %v843, %v809
    %v848 = vsel %vm840, %v844, %v816
    %v849 = vsel %vm841, %v845, %v823
    %v850 = vsel %vm842, %v846, %v830
    %vm851 = vcmp.eq.s32.totalorder %v847, 0
    %vm852 = vcmp.eq.s32.totalorder %v848, 0
    %vm853 = vcmp.eq.s32.totalorder %v849, 0
    %vm854 = vcmp.eq.s32.totalorder %v850, 0
    %v855 = vsel %vm851, 1, 0
    %v856 = vsel %vm852, 1, 0
    %v857 = vsel %vm853, 1, 0
    %v858 = vsel %vm854, 1, 0
    %vm859 = vcmp.eq.s32.totalorder %v855, 1
    %vm860 = vcmp.eq.s32.totalorder %v856, 1
    %vm861 = vcmp.eq.s32.totalorder %v857, 1
    %vm862 = vcmp.eq.s32.totalorder %v858, 1
    %v863 = vsel %vm859, 0.0, %v790
    %v864 = vsel %vm860, 0.0, %v781
    %v865 = vsel %vm861, 0.0, %v783
    %v866 = vsel %vm862, 0.0, %v785
    %vm867 = vcmp.eq.s32.totalorder %v847, 15
    %vm868 = vcmp.eq.s32.totalorder %v848, 15
    %vm869 = vcmp.eq.s32.totalorder %v849, 15
    %vm870 = vcmp.eq.s32.totalorder %v850, 15
    %v871 = vsel %vm867, 1, 0
    %v872 = vsel %vm868, 1, 0
    %v873 = vsel %vm869, 1, 0
    %v874 = vsel %vm870, 1, 0
    %vm875 = vcmp.eq.s32.totalorder %v871, 1
    %vm876 = vcmp.eq.s32.totalorder %v872, 1
    %vm877 = vcmp.eq.s32.totalorder %v873, 1
    %vm878 = vcmp.eq.s32.totalorder %v874, 1
    %v879 = vsel %vm875, 0.0, %v793
    %v880 = vsel %vm876, 0.0, %v795
    %v881 = vsel %vm877, 0.0, %v797
    %v882 = vsel %vm878, 0.0, %v802
    %v883 = vld [vmem:[%s2] sm:$0xff]
    %v884 = vld [vmem:[%s2 + $0x8] sm:$0xff]
    %s885 = scalar_lea.vmem %s2, 16
    %v886 = vld [vmem:[%s885] sm:$0xff]
    %v887 = vld [vmem:[%s885 + $0x8] sm:$0xff]
    %v888 = vsel %vm743, %v771, 0
    %v890 = vsel %vm743, %v772, 0
    %v892 = vsel %vm743, %v773, 0
    %v894 = vsel %vm743, %v774, 0
    %896 = vmatprep.subr.mxu0 0.0
    %897 = vmatpush1.msra.mxu0 %v886
    %898 = vmatprep.subr.mxu0 0.0
    %899 = vmatpush1.msra.mxu0 %v887
    %900 = vmatprep.subr.mxu0 0.0
    %901 = vmatpush1.msra.mxu0 0.0
    %902 = vmatprep.subr.mxu0 0.0
    %903 = vmatpush1.msra.mxu0 0.0
    %904 = vmatprep.subr.mxu0 0.0
    %905 = vmatpush1.msra.mxu0 0.0
    %906 = vmatprep.subr.mxu0 0.0
    %907 = vmatpush1.msra.mxu0 0.0
    %908 = vmatprep.subr.mxu0 0.0
    %909 = vmatpush1.msra.mxu0 0.0
    %910 = vmatprep.subr.mxu0 0.0
    %911 = vmatpush1.msra.mxu0 0.0
    %912 = vmatprep.subr.mxu0 0.0
    %913 = vmatpush1.msra.mxu0 0.0
    %914 = vmatprep.subr.mxu0 0.0
    %915 = vmatpush1.msra.mxu0 0.0
    %916 = vmatprep.subr.mxu0 0.0
    %917 = vmatpush1.msra.mxu0 0.0
    %918 = vmatprep.subr.mxu0 0.0
    %919 = vmatpush1.msra.mxu0 0.0
    %920 = vmatprep.subr.mxu0 0.0
    %921 = vmatpush1.msra.mxu0 0.0
    %922 = vmatprep.subr.mxu0 0.0
    %923 = vmatpush1.msra.mxu0 0.0
    %924 = vmatprep.subr.mxu0 0.0
    %925 = vmatpush1.msra.mxu0 0.0
    %926 = vmatprep.subr.mxu0 0.0
    %927 = vmatpush1.msra.mxu0 0.0
    %928 = vmatprep.subr.mxu0 0.0
    %929 = vmatpush1.msra.mxu0 0.0
    %930 = vmatprep.subr.mxu0 0.0
    %931 = vmatpush1.msra.mxu0 0.0
    %932 = vmatprep.subr.mxu0 0.0
    %933 = vmatpush1.msra.mxu0 0.0
    %934 = vmatprep.subr.mxu0 0.0
    %935 = vmatpush1.msra.mxu0 0.0
    %936 = vmatprep.subr.mxu0 0.0
    %937 = vmatpush1.msra.mxu0 0.0
    %938 = vmatprep.subr.mxu0 0.0
    %939 = vmatpush1.msra.mxu0 0.0
    %940 = vmatprep.subr.mxu0 0.0
    %941 = vmatpush1.msra.mxu0 0.0
    %942 = vmatprep.subr.mxu0 0.0
    %943 = vmatpush1.msra.mxu0 0.0
    %944 = vmatprep.subr.mxu0 0.0
    %945 = vmatpush1.msra.mxu0 0.0
    %946 = vmatprep.subr.mxu0 0.0
    %947 = vmatpush1.msra.mxu0 0.0
    %948 = vmatprep.subr.mxu0 0.0
    %949 = vmatpush1.msra.mxu0 0.0
    %950 = vmatprep.subr.mxu0 0.0
    %951 = vmatpush1.msra.mxu0 0.0
    %952 = vmatprep.subr.mxu0 0.0
    %953 = vmatpush1.msra.mxu0 0.0
    %954 = vmatprep.subr.mxu0 0.0
    %955 = vmatpush1.msra.mxu0 0.0
    %956 = vmatprep.subr.mxu0 0.0
    %957 = vmatpush1.msra.mxu0 0.0
    %958 = vmatprep.subr.mxu0 0.0
    %959 = vmatpush1.msra.mxu0 0.0
    %960 = vmatprep.mubr.f32.mxu0 0.0
    %961 = vmatmul.mubr.f32.gmra.mrb[0].mxu0 %v888
    %v962 = vpop.f32.mrb[0].mxu0
    %v963 = vadd.f32 0.0, %v962
    %v964 = vpop.f32.mrb[0].mxu0
    %965 = vmatprep.mubr.f32.mxu0 0.0
    %966 = vmatmul.mubr.f32.gmra.mrb[0].mxu0 %v890
    %v967 = vpop.f32.mrb[0].mxu0
    %v968 = vadd.f32 0.0, %v967
    %v969 = vpop.f32.mrb[0].mxu0
    %970 = vmatprep.mubr.f32.mxu0 0.0
    %971 = vmatmul.mubr.f32.gmra.mrb[0].mxu0 %v892
    %v972 = vpop.f32.mrb[0].mxu0
    %v973 = vadd.f32 0.0, %v972
    %v974 = vpop.f32.mrb[0].mxu0
    %975 = vmatprep.mubr.f32.mxu0 0.0
    %976 = vmatmul.mubr.f32.gmra.mrb[0].mxu0 %v894
    %v977 = vpop.f32.mrb[0].mxu0
    %v978 = vadd.f32 0.0, %v977
    %v979 = vpop.f32.mrb[0].mxu0
    %980 = vdwg.mxu0
    %v982 = vsel %vm743, %v863, 0
    %v985 = vsel %vm743, %v864, 0
    %v988 = vsel %vm743, %v865, 0
    %v991 = vsel %vm743, %v866, 0
    %993 = vmatprep.subr.mxu0 0.0
    %994 = vmatpush1.msra.mxu0 %v883
    %995 = vmatprep.subr.mxu0 0.0
    %996 = vmatpush1.msra.mxu0 %v884
    %997 = vmatprep.subr.mxu0 0.0
    %998 = vmatpush1.msra.mxu0 0.0
    %999 = vmatprep.subr.mxu0 0.0
    %1000 = vmatpush1.msra.mxu0 0.0
    %1001 = vmatprep.subr.mxu0 0.0
    %1002 = vmatpush1.msra.mxu0 0.0
    %1003 = vmatprep.subr.mxu0 0.0
    %1004 = vmatpush1.msra.mxu0 0.0
    %1005 = vmatprep.subr.mxu0 0.0
    %1006 = vmatpush1.msra.mxu0 0.0
    %1007 = vmatprep.subr.mxu0 0.0
    %1008 = vmatpush1.msra.mxu0 0.0
    %1009 = vmatprep.subr.mxu0 0.0
    %1010 = vmatpush1.msra.mxu0 0.0
    %1011 = vmatprep.subr.mxu0 0.0
    %1012 = vmatpush1.msra.mxu0 0.0
    %1013 = vmatprep.subr.mxu0 0.0
    %1014 = vmatpush1.msra.mxu0 0.0
    %1015 = vmatprep.subr.mxu0 0.0
    %1016 = vmatpush1.msra.mxu0 0.0
    %1017 = vmatprep.subr.mxu0 0.0
    %1018 = vmatpush1.msra.mxu0 0.0
    %1019 = vmatprep.subr.mxu0 0.0
    %1020 = vmatpush1.msra.mxu0 0.0
    %1021 = vmatprep.subr.mxu0 0.0
    %1022 = vmatpush1.msra.mxu0 0.0
    %1023 = vmatprep.subr.mxu0 0.0
    %1024 = vmatpush1.msra.mxu0 0.0
    %1025 = vmatprep.subr.mxu0 0.0
    %1026 = vmatpush1.msra.mxu0 0.0
    %1027 = vmatprep.subr.mxu0 0.0
    %1028 = vmatpush1.msra.mxu0 0.0
    %1029 = vmatprep.subr.mxu0 0.0
    %1030 = vmatpush1.msra.mxu0 0.0
    %1031 = vmatprep.subr.mxu0 0.0
    %1032 = vmatpush1.msra.mxu0 0.0
    %1033 = vmatprep.subr.mxu0 0.0
    %1034 = vmatpush1.msra.mxu0 0.0
    %1035 = vmatprep.subr.mxu0 0.0
    %1036 = vmatpush1.msra.mxu0 0.0
    %1037 = vmatprep.subr.mxu0 0.0
    %1038 = vmatpush1.msra.mxu0 0.0
    %1039 = vmatprep.subr.mxu0 0.0
    %1040 = vmatpush1.msra.mxu0 0.0
    %1041 = vmatprep.subr.mxu0 0.0
    %1042 = vmatpush1.msra.mxu0 0.0
    %1043 = vmatprep.subr.mxu0 0.0
    %1044 = vmatpush1.msra.mxu0 0.0
    %1045 = vmatprep.subr.mxu0 0.0
    %1046 = vmatpush1.msra.mxu0 0.0
    %1047 = vmatprep.subr.mxu0 0.0
    %1048 = vmatpush1.msra.mxu0 0.0
    %1049 = vmatprep.subr.mxu0 0.0
    %1050 = vmatpush1.msra.mxu0 0.0
    %1051 = vmatprep.subr.mxu0 0.0
    %1052 = vmatpush1.msra.mxu0 0.0
    %1053 = vmatprep.subr.mxu0 0.0
    %1054 = vmatpush1.msra.mxu0 0.0
    %1055 = vmatprep.subr.mxu0 0.0
    %1056 = vmatpush1.msra.mxu0 0.0
    %1057 = vmatprep.mubr.f32.mxu0 0.0
    %1058 = vmatmul.mubr.f32.gmra.mrb[0].mxu0 %v982
    %v1059 = vpop.f32.mrb[0].mxu0
    %v1060 = vadd.f32 %v963, %v1059
    %v1061 = vpop.f32.mrb[0].mxu0
    %1062 = vmatprep.mubr.f32.mxu0 0.0
    %1063 = vmatmul.mubr.f32.gmra.mrb[0].mxu0 %v985
    %v1064 = vpop.f32.mrb[0].mxu0
    %v1065 = vadd.f32 %v968, %v1064
    %v1066 = vpop.f32.mrb[0].mxu0
    %1067 = vmatprep.mubr.f32.mxu0 0.0
    %1068 = vmatmul.mubr.f32.gmra.mrb[0].mxu0 %v988
    %v1069 = vpop.f32.mrb[0].mxu0
    %v1070 = vadd.f32 %v973, %v1069
    %v1071 = vpop.f32.mrb[0].mxu0
    %1072 = vmatprep.mubr.f32.mxu0 0.0
    %1073 = vmatmul.mubr.f32.gmra.mrb[0].mxu0 %v991
    %v1074 = vpop.f32.mrb[0].mxu0
    %v1075 = vadd.f32 %v978, %v1074
    %v1076 = vpop.f32.mrb[0].mxu0
    %1077 = vdwg.mxu0
    %s1078 = scalar_lea.vmem %s2, 32
    %v1079 = vld [vmem:[%s1078] sm:$0xff]
    %v1080 = vld [vmem:[%s1078 + $0x8] sm:$0xff]
    %v1082 = vsel %vm743, %v879, 0
    %v1085 = vsel %vm743, %v880, 0
    %v1088 = vsel %vm743, %v881, 0
    %v1091 = vsel %vm743, %v882, 0
    %1093 = vmatprep.subr.mxu0 0.0
    %1094 = vmatpush1.msra.mxu0 %v1079
    %1095 = vmatprep.subr.mxu0 0.0
    %1096 = vmatpush1.msra.mxu0 %v1080
    %1097 = vmatprep.subr.mxu0 0.0
    %1098 = vmatpush1.msra.mxu0 0.0
    %1099 = vmatprep.subr.mxu0 0.0
    %1100 = vmatpush1.msra.mxu0 0.0
    %1101 = vmatprep.subr.mxu0 0.0
    %1102 = vmatpush1.msra.mxu0 0.0
    %1103 = vmatprep.subr.mxu0 0.0
    %1104 = vmatpush1.msra.mxu0 0.0
    %1105 = vmatprep.subr.mxu0 0.0
    %1106 = vmatpush1.msra.mxu0 0.0
    %1107 = vmatprep.subr.mxu0 0.0
    %1108 = vmatpush1.msra.mxu0 0.0
    %1109 = vmatprep.subr.mxu0 0.0
    %1110 = vmatpush1.msra.mxu0 0.0
    %1111 = vmatprep.subr.mxu0 0.0
    %1112 = vmatpush1.msra.mxu0 0.0
    %1113 = vmatprep.subr.mxu0 0.0
    %1114 = vmatpush1.msra.mxu0 0.0
    %1115 = vmatprep.subr.mxu0 0.0
    %1116 = vmatpush1.msra.mxu0 0.0
    %1117 = vmatprep.subr.mxu0 0.0
    %1118 = vmatpush1.msra.mxu0 0.0
    %1119 = vmatprep.subr.mxu0 0.0
    %1120 = vmatpush1.msra.mxu0 0.0
    %1121 = vmatprep.subr.mxu0 0.0
    %1122 = vmatpush1.msra.mxu0 0.0
    %1123 = vmatprep.subr.mxu0 0.0
    %1124 = vmatpush1.msra.mxu0 0.0
    %1125 = vmatprep.subr.mxu0 0.0
    %1126 = vmatpush1.msra.mxu0 0.0
    %1127 = vmatprep.subr.mxu0 0.0
    %1128 = vmatpush1.msra.mxu0 0.0
    %1129 = vmatprep.subr.mxu0 0.0
    %1130 = vmatpush1.msra.mxu0 0.0
    %1131 = vmatprep.subr.mxu0 0.0
    %1132 = vmatpush1.msra.mxu0 0.0
    %1133 = vmatprep.subr.mxu0 0.0
    %1134 = vmatpush1.msra.mxu0 0.0
    %1135 = vmatprep.subr.mxu0 0.0
    %1136 = vmatpush1.msra.mxu0 0.0
    %1137 = vmatprep.subr.mxu0 0.0
    %1138 = vmatpush1.msra.mxu0 0.0
    %1139 = vmatprep.subr.mxu0 0.0
    %1140 = vmatpush1.msra.mxu0 0.0
    %1141 = vmatprep.subr.mxu0 0.0
    %1142 = vmatpush1.msra.mxu0 0.0
    %1143 = vmatprep.subr.mxu0 0.0
    %1144 = vmatpush1.msra.mxu0 0.0
    %1145 = vmatprep.subr.mxu0 0.0
    %1146 = vmatpush1.msra.mxu0 0.0
    %1147 = vmatprep.subr.mxu0 0.0
    %1148 = vmatpush1.msra.mxu0 0.0
    %1149 = vmatprep.subr.mxu0 0.0
    %1150 = vmatpush1.msra.mxu0 0.0
    %1151 = vmatprep.subr.mxu0 0.0
    %1152 = vmatpush1.msra.mxu0 0.0
    %1153 = vmatprep.subr.mxu0 0.0
    %1154 = vmatpush1.msra.mxu0 0.0
    %1155 = vmatprep.subr.mxu0 0.0
    %1156 = vmatpush1.msra.mxu0 0.0
    %1157 = vmatprep.mubr.f32.mxu0 0.0
    %1158 = vmatmul.mubr.f32.gmra.mrb[0].mxu0 %v1082
    %v1159 = vpop.f32.mrb[0].mxu0
    %v1160 = vadd.f32 0.0, %v1159
    %v1161 = vpop.f32.mrb[0].mxu0
    %1162 = vmatprep.mubr.f32.mxu0 0.0
    %1163 = vmatmul.mubr.f32.gmra.mrb[0].mxu0 %v1085
    %v1164 = vpop.f32.mrb[0].mxu0
    %v1165 = vadd.f32 0.0, %v1164
    %v1166 = vpop.f32.mrb[0].mxu0
    %1167 = vmatprep.mubr.f32.mxu0 0.0
    %1168 = vmatmul.mubr.f32.gmra.mrb[0].mxu0 %v1088
    %v1169 = vpop.f32.mrb[0].mxu0
    %v1170 = vadd.f32 0.0, %v1169
    %v1171 = vpop.f32.mrb[0].mxu0
    %1172 = vmatprep.mubr.f32.mxu0 0.0
    %1173 = vmatmul.mubr.f32.gmra.mrb[0].mxu0 %v1091
    %v1174 = vpop.f32.mrb[0].mxu0
    %v1175 = vadd.f32 0.0, %v1174
    %v1176 = vpop.f32.mrb[0].mxu0
    %1177 = vdwg.mxu0
    %v1178 = vadd.f32 %v1060, %v1160
    %v1179 = vadd.f32 %v1065, %v1165
    %v1180 = vadd.f32 %v1070, %v1170
    %v1181 = vadd.f32 %v1075, %v1175
    %vm1182 = vcmp.gt.f32.partialorder %v1178, 0.0
    %vm1183 = vcmp.gt.f32.partialorder %v1179, 0.0
    %vm1184 = vcmp.gt.f32.partialorder %v1180, 0.0
    %vm1185 = vcmp.gt.f32.partialorder %v1181, 0.0
    %v1186 = vmul.f32 %v1178, 0.05
    %v1187 = vmul.f32 %v1179, 0.05
    %v1188 = vmul.f32 %v1180, 0.05
    %v1189 = vmul.f32 %v1181, 0.05
    %v1190 = vsel %vm1182, %v1178, %v1186
    %v1191 = vsel %vm1183, %v1179, %v1187
    %v1192 = vsel %vm1184, %v1180, %v1188
    %v1193 = vsel %vm1185, %v1181, %v1189
    %vm1194 = vcmask 195584
    %1195 = vst.msk [vmem:[#allocation3] sm:$0xff] %vm1194, %v1190
    %1196 = vst.msk [vmem:[#allocation3 + $0x8] sm:$0xff] %vm1194, %v1191
    %1197 = vst.msk [vmem:[#allocation3 + $0x10] sm:$0xff] %vm1194, %v1192
    %1198 = vst.msk [vmem:[#allocation3 + $0x18] sm:$0xff] %vm1194, %v1193
    %v1199 = vld [vmem:[#allocation3] ss:$2 sm:$0xff]
    %s1200 = scalar_lea.vmem [#allocation3], 16
    %v1201 = vld [vmem:[%s1200] ss:$2 sm:$0xff]
    %s1202 = scalar_lea.vmem [#allocation3], 1
    %v1203 = vld [vmem:[%s1202] ss:$2 sm:$0xff]
    %s1204 = scalar_lea.vmem [#allocation3], 17
    %v1205 = vld [vmem:[%s1204] ss:$2 sm:$0xff]
    %v1206 = vadd.f32 %v1199, %v1203
    %v1207 = vadd.f32 %v1201, %v1205
    %v1208 = vmul.f32 %v1206, 0.5
    %v1209 = vmul.f32 %v1207, 0.5
    %v1212 = vrot.slane %v1208, 7
    %v1213 = vrot.slane %v1209, 7
    %v1214 = vsel %vm97, %v1212, %v1213
    %v1217 = vsel %vm97, 0.0, %v1212
    %v1218 = vrot.slane %v1208, 1
    %v1219 = vrot.slane %v1209, 1
    %v1220 = vsel %vm122, %v1218, %v1219
    %v1223 = vsel %vm122, %v1219, 0.0
    %vm1224 = vcmp.lt.s32.totalorder %v148, 0
    %v1225 = vsub.s32 0, %v148
    %v1226 = vsel %vm1224, %v1225, %v148
    %v1227 = vshrl.u32 %v1226, 3
    %v1228 = vand.u32 %v1226, 7
    %v1229 = vsub.s32 0, %v1228
    %v1230 = vsel %vm1224, %v1229, %v1228
    %vm1231 = vcmp.lt.s32.totalorder %v149, 0
    %v1232 = vsub.s32 0, %v149
    %v1233 = vsel %vm1231, %v1232, %v149
    %v1234 = vshrl.u32 %v1233, 3
    %v1235 = vand.u32 %v1233, 7
    %v1236 = vsub.s32 0, %v1235
    %v1237 = vsel %vm1231, %v1236, %v1235
    %vm1238 = vcmp.ne.s32.totalorder %v1230, 0
    %vm1239 = vcmp.ne.s32.totalorder %v1237, 0
    %vm1240 = vcmp.lt.s32.totalorder %v1230, 0
    %vm1241 = vcmp.lt.s32.totalorder %v1237, 0
    %vm1242 = vmand %vm1240, %vm1238
    %vm1243 = vmand %vm1241, %vm1239
    %v1244 = vadd.s32 %v1230, 8
    %v1245 = vadd.s32 %v1237, 8
    %v1246 = vsel %vm1242, %v1244, %v1230
    %v1247 = vsel %vm1243, %v1245, %v1237
    %vm1248 = vcmp.eq.s32.totalorder %v1246, 0
    %vm1249 = vcmp.eq.s32.totalorder %v1247, 0
    %v1250 = vsel %vm1248, 1, 0
    %v1251 = vsel %vm1249, 1, 0
    %vm1252 = vcmp.eq.s32.totalorder %v1250, 1
    %vm1253 = vcmp.eq.s32.totalorder %v1251, 1
    %v1254 = vsel %vm1252, 0.0, %v1217
    %v1255 = vsel %vm1253, 0.0, %v1214
    %vm1256 = vcmp.eq.s32.totalorder %v1246, 7
    %vm1257 = vcmp.eq.s32.totalorder %v1247, 7
    %v1258 = vsel %vm1256, 1, 0
    %v1259 = vsel %vm1257, 1, 0
    %vm1260 = vcmp.eq.s32.totalorder %v1258, 1
    %vm1261 = vcmp.eq.s32.totalorder %v1259, 1
    %v1262 = vsel %vm1260, 0.0, %v1220
    %v1263 = vsel %vm1261, 0.0, %v1223
    %v1264 = vld [vmem:[#allocation9] sm:$0xff]
    %v1265 = vld [vmem:[#allocation9 + $0x8] sm:$0xff]
    %v1266 = vld [vmem:[#allocation9 + $0x10] sm:$0xff]
    %s1267 = scalar_lea.vmem [#allocation9], 24
    %v1268 = vld [vmem:[%s1267] sm:$0xff]
    %v1269 = vld [vmem:[%s1267 + $0x8] sm:$0xff]
    %v1270 = vld [vmem:[%s1267 + $0x10] sm:$0xff]
    %v1271 = vsel %vm1194, %v1208, 0
    %v1273 = vsel %vm1194, %v1209, 0
    %1275 = vmatprep.subr.mxu0 0.0
    %1276 = vmatpush1.msra.mxu0 %v1268
    %1277 = vmatprep.subr.mxu0 0.0
    %1278 = vmatpush1.msra.mxu0 %v1269
    %1279 = vmatprep.subr.mxu0 0.0
    %1280 = vmatpush1.msra.mxu0 %v1270
    %1281 = vmatprep.subr.mxu0 0.0
    %1282 = vmatpush1.msra.mxu0 0.0
    %1283 = vmatprep.subr.mxu0 0.0
    %1284 = vmatpush1.msra.mxu0 0.0
    %1285 = vmatprep.subr.mxu0 0.0
    %1286 = vmatpush1.msra.mxu0 0.0
    %1287 = vmatprep.subr.mxu0 0.0
    %1288 = vmatpush1.msra.mxu0 0.0
    %1289 = vmatprep.subr.mxu0 0.0
    %1290 = vmatpush1.msra.mxu0 0.0
    %1291 = vmatprep.subr.mxu0 0.0
    %1292 = vmatpush1.msra.mxu0 0.0
    %1293 = vmatprep.subr.mxu0 0.0
    %1294 = vmatpush1.msra.mxu0 0.0
    %1295 = vmatprep.subr.mxu0 0.0
    %1296 = vmatpush1.msra.mxu0 0.0
    %1297 = vmatprep.subr.mxu0 0.0
    %1298 = vmatpush1.msra.mxu0 0.0
    %1299 = vmatprep.subr.mxu0 0.0
    %1300 = vmatpush1.msra.mxu0 0.0
    %1301 = vmatprep.subr.mxu0 0.0
    %1302 = vmatpush1.msra.mxu0 0.0
    %1303 = vmatprep.subr.mxu0 0.0
    %1304 = vmatpush1.msra.mxu0 0.0
    %1305 = vmatprep.subr.mxu0 0.0
    %1306 = vmatpush1.msra.mxu0 0.0
    %1307 = vmatprep.subr.mxu0 0.0
    %1308 = vmatpush1.msra.mxu0 0.0
    %1309 = vmatprep.subr.mxu0 0.0
    %1310 = vmatpush1.msra.mxu0 0.0
    %1311 = vmatprep.subr.mxu0 0.0
    %1312 = vmatpush1.msra.mxu0 0.0
    %1313 = vmatprep.subr.mxu0 0.0
    %1314 = vmatpush1.msra.mxu0 0.0
    %1315 = vmatprep.subr.mxu0 0.0
    %1316 = vmatpush1.msra.mxu0 0.0
    %1317 = vmatprep.subr.mxu0 0.0
    %1318 = vmatpush1.msra.mxu0 0.0
    %1319 = vmatprep.subr.mxu0 0.0
    %1320 = vmatpush1.msra.mxu0 0.0
    %1321 = vmatprep.subr.mxu0 0.0
    %1322 = vmatpush1.msra.mxu0 0.0
    %1323 = vmatprep.subr.mxu0 0.0
    %1324 = vmatpush1.msra.mxu0 0.0
    %1325 = vmatprep.subr.mxu0 0.0
    %1326 = vmatpush1.msra.mxu0 0.0
    %1327 = vmatprep.subr.mxu0 0.0
    %1328 = vmatpush1.msra.mxu0 0.0
    %1329 = vmatprep.subr.mxu0 0.0
    %1330 = vmatpush1.msra.mxu0 0.0
    %1331 = vmatprep.subr.mxu0 0.0
    %1332 = vmatpush1.msra.mxu0 0.0
    %1333 = vmatprep.subr.mxu0 0.0
    %1334 = vmatpush1.msra.mxu0 0.0
    %1335 = vmatprep.subr.mxu0 0.0
    %1336 = vmatpush1.msra.mxu0 0.0
    %1337 = vmatprep.subr.mxu0 0.0
    %1338 = vmatpush1.msra.mxu0 0.0
    %1339 = vmatprep.mubr.f32.mxu0 0.0
    %1340 = vmatmul.mubr.f32.gmra.mrb[0].mxu0 %v1271
    %v1341 = vpop.f32.mrb[0].mxu0
    %v1342 = vadd.f32 0.0, %v1341
    %v1343 = vpop.f32.mrb[0].mxu0
    %1344 = vmatprep.mubr.f32.mxu0 0.0
    %1345 = vmatmul.mubr.f32.gmra.mrb[0].mxu0 %v1273
    %v1346 = vpop.f32.mrb[0].mxu0
    %v1347 = vadd.f32 0.0, %v1346
    %v1348 = vpop.f32.mrb[0].mxu0
    %1349 = vdwg.mxu0
    %v1351 = vsel %vm1194, %v1254, 0
    %v1354 = vsel %vm1194, %v1255, 0
    %1356 = vmatprep.subr.mxu0 0.0
    %1357 = vmatpush1.msra.mxu0 %v1264
    %1358 = vmatprep.subr.mxu0 0.0
    %1359 = vmatpush1.msra.mxu0 %v1265
    %1360 = vmatprep.subr.mxu0 0.0
    %1361 = vmatpush1.msra.mxu0 %v1266
    %1362 = vmatprep.subr.mxu0 0.0
    %1363 = vmatpush1.msra.mxu0 0.0
    %1364 = vmatprep.subr.mxu0 0.0
    %1365 = vmatpush1.msra.mxu0 0.0
    %1366 = vmatprep.subr.mxu0 0.0
    %1367 = vmatpush1.msra.mxu0 0.0
    %1368 = vmatprep.subr.mxu0 0.0
    %1369 = vmatpush1.msra.mxu0 0.0
    %1370 = vmatprep.subr.mxu0 0.0
    %1371 = vmatpush1.msra.mxu0 0.0
    %1372 = vmatprep.subr.mxu0 0.0
    %1373 = vmatpush1.msra.mxu0 0.0
    %1374 = vmatprep.subr.mxu0 0.0
    %1375 = vmatpush1.msra.mxu0 0.0
    %1376 = vmatprep.subr.mxu0 0.0
    %1377 = vmatpush1.msra.mxu0 0.0
    %1378 = vmatprep.subr.mxu0 0.0
    %1379 = vmatpush1.msra.mxu0 0.0
    %1380 = vmatprep.subr.mxu0 0.0
    %1381 = vmatpush1.msra.mxu0 0.0
    %1382 = vmatprep.subr.mxu0 0.0
    %1383 = vmatpush1.msra.mxu0 0.0
    %1384 = vmatprep.subr.mxu0 0.0
    %1385 = vmatpush1.msra.mxu0 0.0
    %1386 = vmatprep.subr.mxu0 0.0
    %1387 = vmatpush1.msra.mxu0 0.0
    %1388 = vmatprep.subr.mxu0 0.0
    %1389 = vmatpush1.msra.mxu0 0.0
    %1390 = vmatprep.subr.mxu0 0.0
    %1391 = vmatpush1.msra.mxu0 0.0
    %1392 = vmatprep.subr.mxu0 0.0
    %1393 = vmatpush1.msra.mxu0 0.0
    %1394 = vmatprep.subr.mxu0 0.0
    %1395 = vmatpush1.msra.mxu0 0.0
    %1396 = vmatprep.subr.mxu0 0.0
    %1397 = vmatpush1.msra.mxu0 0.0
    %1398 = vmatprep.subr.mxu0 0.0
    %1399 = vmatpush1.msra.mxu0 0.0
    %1400 = vmatprep.subr.mxu0 0.0
    %1401 = vmatpush1.msra.mxu0 0.0
    %1402 = vmatprep.subr.mxu0 0.0
    %1403 = vmatpush1.msra.mxu0 0.0
    %1404 = vmatprep.subr.mxu0 0.0
    %1405 = vmatpush1.msra.mxu0 0.0
    %1406 = vmatprep.subr.mxu0 0.0
    %1407 = vmatpush1.msra.mxu0 0.0
    %1408 = vmatprep.subr.mxu0 0.0
    %1409 = vmatpush1.msra.mxu0 0.0
    %1410 = vmatprep.subr.mxu0 0.0
    %1411 = vmatpush1.msra.mxu0 0.0
    %1412 = vmatprep.subr.mxu0 0.0
    %1413 = vmatpush1.msra.mxu0 0.0
    %1414 = vmatprep.subr.mxu0 0.0
    %1415 = vmatpush1.msra.mxu0 0.0
    %1416 = vmatprep.subr.mxu0 0.0
    %1417 = vmatpush1.msra.mxu0 0.0
    %1418 = vmatprep.subr.mxu0 0.0
    %1419 = vmatpush1.msra.mxu0 0.0
    %1420 = vmatprep.mubr.f32.mxu0 0.0
    %1421 = vmatmul.mubr.f32.gmra.mrb[0].mxu0 %v1351
    %v1422 = vpop.f32.mrb[0].mxu0
    %v1423 = vadd.f32 %v1342, %v1422
    %v1424 = vpop.f32.mrb[0].mxu0
    %1425 = vmatprep.mubr.f32.mxu0 0.0
    %1426 = vmatmul.mubr.f32.gmra.mrb[0].mxu0 %v1354
    %v1427 = vpop.f32.mrb[0].mxu0
    %v1428 = vadd.f32 %v1347, %v1427
    %v1429 = vpop.f32.mrb[0].mxu0
    %1430 = vdwg.mxu0
    %s1431 = scalar_lea.vmem [#allocation9], 48
    %v1432 = vld [vmem:[%s1431] sm:$0xff]
    %v1433 = vld [vmem:[%s1431 + $0x8] sm:$0xff]
    %v1434 = vld [vmem:[%s1431 + $0x10] sm:$0xff]
    %v1436 = vsel %vm1194, %v1262, 0
    %v1439 = vsel %vm1194, %v1263, 0
    %1441 = vmatprep.subr.mxu0 0.0
    %1442 = vmatpush1.msra.mxu0 %v1432
    %1443 = vmatprep.subr.mxu0 0.0
    %1444 = vmatpush1.msra.mxu0 %v1433
    %1445 = vmatprep.subr.mxu0 0.0
    %1446 = vmatpush1.msra.mxu0 %v1434
    %1447 = vmatprep.subr.mxu0 0.0
    %1448 = vmatpush1.msra.mxu0 0.0
    %1449 = vmatprep.subr.mxu0 0.0
    %1450 = vmatpush1.msra.mxu0 0.0
    %1451 = vmatprep.subr.mxu0 0.0
    %1452 = vmatpush1.msra.mxu0 0.0
    %1453 = vmatprep.subr.mxu0 0.0
    %1454 = vmatpush1.msra.mxu0 0.0
    %1455 = vmatprep.subr.mxu0 0.0
    %1456 = vmatpush1.msra.mxu0 0.0
    %1457 = vmatprep.subr.mxu0 0.0
    %1458 = vmatpush1.msra.mxu0 0.0
    %1459 = vmatprep.subr.mxu0 0.0
    %1460 = vmatpush1.msra.mxu0 0.0
    %1461 = vmatprep.subr.mxu0 0.0
    %1462 = vmatpush1.msra.mxu0 0.0
    %1463 = vmatprep.subr.mxu0 0.0
    %1464 = vmatpush1.msra.mxu0 0.0
    %1465 = vmatprep.subr.mxu0 0.0
    %1466 = vmatpush1.msra.mxu0 0.0
    %1467 = vmatprep.subr.mxu0 0.0
    %1468 = vmatpush1.msra.mxu0 0.0
    %1469 = vmatprep.subr.mxu0 0.0
    %1470 = vmatpush1.msra.mxu0 0.0
    %1471 = vmatprep.subr.mxu0 0.0
    %1472 = vmatpush1.msra.mxu0 0.0
    %1473 = vmatprep.subr.mxu0 0.0
    %1474 = vmatpush1.msra.mxu0 0.0
    %1475 = vmatprep.subr.mxu0 0.0
    %1476 = vmatpush1.msra.mxu0 0.0
    %1477 = vmatprep.subr.mxu0 0.0
    %1478 = vmatpush1.msra.mxu0 0.0
    %1479 = vmatprep.subr.mxu0 0.0
    %1480 = vmatpush1.msra.mxu0 0.0
    %1481 = vmatprep.subr.mxu0 0.0
    %1482 = vmatpush1.msra.mxu0 0.0
    %1483 = vmatprep.subr.mxu0 0.0
    %1484 = vmatpush1.msra.mxu0 0.0
    %1485 = vmatprep.subr.mxu0 0.0
    %1486 = vmatpush1.msra.mxu0 0.0
    %1487 = vmatprep.subr.mxu0 0.0
    %1488 = vmatpush1.msra.mxu0 0.0
    %1489 = vmatprep.subr.mxu0 0.0
    %1490 = vmatpush1.msra.mxu0 0.0
    %1491 = vmatprep.subr.mxu0 0.0
    %1492 = vmatpush1.msra.mxu0 0.0
    %1493 = vmatprep.subr.mxu0 0.0
    %1494 = vmatpush1.msra.mxu0 0.0
    %1495 = vmatprep.subr.mxu0 0.0
    %1496 = vmatpush1.msra.mxu0 0.0
    %1497 = vmatprep.subr.mxu0 0.0
    %1498 = vmatpush1.msra.mxu0 0.0
    %1499 = vmatprep.subr.mxu0 0.0
    %1500 = vmatpush1.msra.mxu0 0.0
    %1501 = vmatprep.subr.mxu0 0.0
    %1502 = vmatpush1.msra.mxu0 0.0
    %1503 = vmatprep.subr.mxu0 0.0
    %1504 = vmatpush1.msra.mxu0 0.0
    %1505 = vmatprep.mubr.f32.mxu0 0.0
    %1506 = vmatmul.mubr.f32.gmra.mrb[0].mxu0 %v1436
    %v1507 = vpop.f32.mrb[0].mxu0
    %v1508 = vadd.f32 0.0, %v1507
    %v1509 = vpop.f32.mrb[0].mxu0
    %1510 = vmatprep.mubr.f32.mxu0 0.0
    %1511 = vmatmul.mubr.f32.gmra.mrb[0].mxu0 %v1439
    %v1512 = vpop.f32.mrb[0].mxu0
    %v1513 = vadd.f32 0.0, %v1512
    %v1514 = vpop.f32.mrb[0].mxu0
    %1515 = vdwg.mxu0
    %v1516 = vadd.f32 %v1423, %v1508
    %v1517 = vadd.f32 %v1428, %v1513
    %vm1518 = vcmp.gt.f32.partialorder %v1516, 0.0
    %vm1519 = vcmp.gt.f32.partialorder %v1517, 0.0
    %v1520 = vmul.f32 %v1516, 0.05
    %v1521 = vmul.f32 %v1517, 0.05
    %v1522 = vsel %vm1518, %v1516, %v1520
    %v1523 = vsel %vm1519, %v1517, %v1521
    %vm1524 = vcmask 261120
    %1525 = vst.msk [vmem:[#allocation4] sm:$0xff] %vm1524, %v1522
    %1526 = vst.msk [vmem:[#allocation4 + $0x8] sm:$0xff] %vm1524, %v1523
    %v1527 = vld [vmem:[#allocation4] ss:$2 sm:$0xff]
    %s1528 = scalar_lea.vmem [#allocation4], 1
    %v1529 = vld [vmem:[%s1528] ss:$2 sm:$0xff]
    %v1530 = vadd.f32 %v1527, %v1529
    %v1531 = vmul.f32 %v1530, 0.5
    %1532 = vst.msk [vmem:[#allocation5] sm:$0xff] %vm1524, %v1531
    %v1533 = vld [vmem:[#allocation5] ss:$4 sm:$0x3]
    %v1534 = vld [vmem:[%s4] sm:$0xff]
    %v1535 = vld [vmem:[%s4 + $0x8] sm:$0xff]
    %v1536 = vld [vmem:[%s4 + $0x10] sm:$0xff]
    %v1537 = vld [vmem:[%s4 + $0x18] sm:$0xff]
    %s1538 = scalar_lea.vmem [#allocation5], 1
    %v1539 = vld [vmem:[%s1538] ss:$4 sm:$0x3]
    %s1540 = scalar_lea.vmem %s4, 32
    %v1541 = vld [vmem:[%s1540] sm:$0xff]
    %v1542 = vld [vmem:[%s1540 + $0x8] sm:$0xff]
    %v1543 = vld [vmem:[%s1540 + $0x10] sm:$0xff]
    %v1544 = vld [vmem:[%s1540 + $0x18] sm:$0xff]
    %v1546 = vsel %vm1524, %v1539, 0
    %1548 = vmatprep.subr.mxu0 0.0
    %1549 = vmatpush1.msra.mxu0 %v1541
    %1550 = vmatprep.subr.mxu0 0.0
    %1551 = vmatpush1.msra.mxu0 %v1542
    %1552 = vmatprep.subr.mxu0 0.0
    %1553 = vmatpush1.msra.mxu0 %v1543
    %1554 = vmatprep.subr.mxu0 0.0
    %1555 = vmatpush1.msra.mxu0 %v1544
    %1556 = vmatprep.subr.mxu0 0.0
    %1557 = vmatpush1.msra.mxu0 0.0
    %1558 = vmatprep.subr.mxu0 0.0
    %1559 = vmatpush1.msra.mxu0 0.0
    %1560 = vmatprep.subr.mxu0 0.0
    %1561 = vmatpush1.msra.mxu0 0.0
    %1562 = vmatprep.subr.mxu0 0.0
    %1563 = vmatpush1.msra.mxu0 0.0
    %1564 = vmatprep.subr.mxu0 0.0
    %1565 = vmatpush1.msra.mxu0 0.0
    %1566 = vmatprep.subr.mxu0 0.0
    %1567 = vmatpush1.msra.mxu0 0.0
    %1568 = vmatprep.subr.mxu0 0.0
    %1569 = vmatpush1.msra.mxu0 0.0
    %1570 = vmatprep.subr.mxu0 0.0
    %1571 = vmatpush1.msra.mxu0 0.0
    %1572 = vmatprep.subr.mxu0 0.0
    %1573 = vmatpush1.msra.mxu0 0.0
    %1574 = vmatprep.subr.mxu0 0.0
    %1575 = vmatpush1.msra.mxu0 0.0
    %1576 = vmatprep.subr.mxu0 0.0
    %1577 = vmatpush1.msra.mxu0 0.0
    %1578 = vmatprep.subr.mxu0 0.0
    %1579 = vmatpush1.msra.mxu0 0.0
    %1580 = vmatprep.subr.mxu0 0.0
    %1581 = vmatpush1.msra.mxu0 0.0
    %1582 = vmatprep.subr.mxu0 0.0
    %1583 = vmatpush1.msra.mxu0 0.0
    %1584 = vmatprep.subr.mxu0 0.0
    %1585 = vmatpush1.msra.mxu0 0.0
    %1586 = vmatprep.subr.mxu0 0.0
    %1587 = vmatpush1.msra.mxu0 0.0
    %1588 = vmatprep.subr.mxu0 0.0
    %1589 = vmatpush1.msra.mxu0 0.0
    %1590 = vmatprep.subr.mxu0 0.0
    %1591 = vmatpush1.msra.mxu0 0.0
    %1592 = vmatprep.subr.mxu0 0.0
    %1593 = vmatpush1.msra.mxu0 0.0
    %1594 = vmatprep.subr.mxu0 0.0
    %1595 = vmatpush1.msra.mxu0 0.0
    %1596 = vmatprep.subr.mxu0 0.0
    %1597 = vmatpush1.msra.mxu0 0.0
    %1598 = vmatprep.subr.mxu0 0.0
    %1599 = vmatpush1.msra.mxu0 0.0
    %1600 = vmatprep.subr.mxu0 0.0
    %1601 = vmatpush1.msra.mxu0 0.0
    %1602 = vmatprep.subr.mxu0 0.0
    %1603 = vmatpush1.msra.mxu0 0.0
    %1604 = vmatprep.subr.mxu0 0.0
    %1605 = vmatpush1.msra.mxu0 0.0
    %1606 = vmatprep.subr.mxu0 0.0
    %1607 = vmatpush1.msra.mxu0 0.0
    %1608 = vmatprep.subr.mxu0 0.0
    %1609 = vmatpush1.msra.mxu0 0.0
    %1610 = vmatprep.subr.mxu0 0.0
    %1611 = vmatpush1.msra.mxu0 0.0
    %1612 = vmatprep.mubr.f32.mxu0 0.0
    %1613 = vmatmul.mubr.f32.gmra.mrb[0].mxu0 %v1546
    %v1614 = vpop.f32.mrb[0].mxu0
    %v1615 = vadd.f32 0.0, %v1614
    %v1616 = vpop.f32.mrb[0].mxu0
    %1617 = vdwg.mxu0
    %v1619 = vsel %vm1524, %v1533, 0
    %1621 = vmatprep.subr.mxu0 0.0
    %1622 = vmatpush1.msra.mxu0 %v1534
    %1623 = vmatprep.subr.mxu0 0.0
    %1624 = vmatpush1.msra.mxu0 %v1535
    %1625 = vmatprep.subr.mxu0 0.0
    %1626 = vmatpush1.msra.mxu0 %v1536
    %1627 = vmatprep.subr.mxu0 0.0
    %1628 = vmatpush1.msra.mxu0 %v1537
    %1629 = vmatprep.subr.mxu0 0.0
    %1630 = vmatpush1.msra.mxu0 0.0
    %1631 = vmatprep.subr.mxu0 0.0
    %1632 = vmatpush1.msra.mxu0 0.0
    %1633 = vmatprep.subr.mxu0 0.0
    %1634 = vmatpush1.msra.mxu0 0.0
    %1635 = vmatprep.subr.mxu0 0.0
    %1636 = vmatpush1.msra.mxu0 0.0
    %1637 = vmatprep.subr.mxu0 0.0
    %1638 = vmatpush1.msra.mxu0 0.0
    %1639 = vmatprep.subr.mxu0 0.0
    %1640 = vmatpush1.msra.mxu0 0.0
    %1641 = vmatprep.subr.mxu0 0.0
    %1642 = vmatpush1.msra.mxu0 0.0
    %1643 = vmatprep.subr.mxu0 0.0
    %1644 = vmatpush1.msra.mxu0 0.0
    %1645 = vmatprep.subr.mxu0 0.0
    %1646 = vmatpush1.msra.mxu0 0.0
    %1647 = vmatprep.subr.mxu0 0.0
    %1648 = vmatpush1.msra.mxu0 0.0
    %1649 = vmatprep.subr.mxu0 0.0
    %1650 = vmatpush1.msra.mxu0 0.0
    %1651 = vmatprep.subr.mxu0 0.0
    %1652 = vmatpush1.msra.mxu0 0.0
    %1653 = vmatprep.subr.mxu0 0.0
    %1654 = vmatpush1.msra.mxu0 0.0
    %1655 = vmatprep.subr.mxu0 0.0
    %1656 = vmatpush1.msra.mxu0 0.0
    %1657 = vmatprep.subr.mxu0 0.0
    %1658 = vmatpush1.msra.mxu0 0.0
    %1659 = vmatprep.subr.mxu0 0.0
    %1660 = vmatpush1.msra.mxu0 0.0
    %1661 = vmatprep.subr.mxu0 0.0
    %1662 = vmatpush1.msra.mxu0 0.0
    %1663 = vmatprep.subr.mxu0 0.0
    %1664 = vmatpush1.msra.mxu0 0.0
    %1665 = vmatprep.subr.mxu0 0.0
    %1666 = vmatpush1.msra.mxu0 0.0
    %1667 = vmatprep.subr.mxu0 0.0
    %1668 = vmatpush1.msra.mxu0 0.0
    %1669 = vmatprep.subr.mxu0 0.0
    %1670 = vmatpush1.msra.mxu0 0.0
    %1671 = vmatprep.subr.mxu0 0.0
    %1672 = vmatpush1.msra.mxu0 0.0
    %1673 = vmatprep.subr.mxu0 0.0
    %1674 = vmatpush1.msra.mxu0 0.0
    %1675 = vmatprep.subr.mxu0 0.0
    %1676 = vmatpush1.msra.mxu0 0.0
    %1677 = vmatprep.subr.mxu0 0.0
    %1678 = vmatpush1.msra.mxu0 0.0
    %1679 = vmatprep.subr.mxu0 0.0
    %1680 = vmatpush1.msra.mxu0 0.0
    %1681 = vmatprep.subr.mxu0 0.0
    %1682 = vmatpush1.msra.mxu0 0.0
    %1683 = vmatprep.subr.mxu0 0.0
    %1684 = vmatpush1.msra.mxu0 0.0
    %1685 = vmatprep.mubr.f32.mxu0 0.0
    %1686 = vmatmul.mubr.f32.gmra.mrb[0].mxu0 %v1619
    %v1687 = vpop.f32.mrb[0].mxu0
    %v1688 = vadd.f32 %v1615, %v1687
    %v1689 = vpop.f32.mrb[0].mxu0
    %1690 = vdwg.mxu0
    %s1691 = scalar_lea.vmem [#allocation5], 2
    %v1692 = vld [vmem:[%s1691] ss:$4 sm:$0x3]
    %s1693 = scalar_lea.vmem %s4, 64
    %v1694 = vld [vmem:[%s1693] sm:$0xff]
    %v1695 = vld [vmem:[%s1693 + $0x8] sm:$0xff]
    %v1696 = vld [vmem:[%s1693 + $0x10] sm:$0xff]
    %v1697 = vld [vmem:[%s1693 + $0x18] sm:$0xff]
    %v1699 = vsel %vm1524, %v1692, 0
    %1701 = vmatprep.subr.mxu0 0.0
    %1702 = vmatpush1.msra.mxu0 %v1694
    %1703 = vmatprep.subr.mxu0 0.0
    %1704 = vmatpush1.msra.mxu0 %v1695
    %1705 = vmatprep.subr.mxu0 0.0
    %1706 = vmatpush1.msra.mxu0 %v1696
    %1707 = vmatprep.subr.mxu0 0.0
    %1708 = vmatpush1.msra.mxu0 %v1697
    %1709 = vmatprep.subr.mxu0 0.0
    %1710 = vmatpush1.msra.mxu0 0.0
    %1711 = vmatprep.subr.mxu0 0.0
    %1712 = vmatpush1.msra.mxu0 0.0
    %1713 = vmatprep.subr.mxu0 0.0
    %1714 = vmatpush1.msra.mxu0 0.0
    %1715 = vmatprep.subr.mxu0 0.0
    %1716 = vmatpush1.msra.mxu0 0.0
    %1717 = vmatprep.subr.mxu0 0.0
    %1718 = vmatpush1.msra.mxu0 0.0
    %1719 = vmatprep.subr.mxu0 0.0
    %1720 = vmatpush1.msra.mxu0 0.0
    %1721 = vmatprep.subr.mxu0 0.0
    %1722 = vmatpush1.msra.mxu0 0.0
    %1723 = vmatprep.subr.mxu0 0.0
    %1724 = vmatpush1.msra.mxu0 0.0
    %1725 = vmatprep.subr.mxu0 0.0
    %1726 = vmatpush1.msra.mxu0 0.0
    %1727 = vmatprep.subr.mxu0 0.0
    %1728 = vmatpush1.msra.mxu0 0.0
    %1729 = vmatprep.subr.mxu0 0.0
    %1730 = vmatpush1.msra.mxu0 0.0
    %1731 = vmatprep.subr.mxu0 0.0
    %1732 = vmatpush1.msra.mxu0 0.0
    %1733 = vmatprep.subr.mxu0 0.0
    %1734 = vmatpush1.msra.mxu0 0.0
    %1735 = vmatprep.subr.mxu0 0.0
    %1736 = vmatpush1.msra.mxu0 0.0
    %1737 = vmatprep.subr.mxu0 0.0
    %1738 = vmatpush1.msra.mxu0 0.0
    %1739 = vmatprep.subr.mxu0 0.0
    %1740 = vmatpush1.msra.mxu0 0.0
    %1741 = vmatprep.subr.mxu0 0.0
    %1742 = vmatpush1.msra.mxu0 0.0
    %1743 = vmatprep.subr.mxu0 0.0
    %1744 = vmatpush1.msra.mxu0 0.0
    %1745 = vmatprep.subr.mxu0 0.0
    %1746 = vmatpush1.msra.mxu0 0.0
    %1747 = vmatprep.subr.mxu0 0.0
    %1748 = vmatpush1.msra.mxu0 0.0
    %1749 = vmatprep.subr.mxu0 0.0
    %1750 = vmatpush1.msra.mxu0 0.0
    %1751 = vmatprep.subr.mxu0 0.0
    %1752 = vmatpush1.msra.mxu0 0.0
    %1753 = vmatprep.subr.mxu0 0.0
    %1754 = vmatpush1.msra.mxu0 0.0
    %1755 = vmatprep.subr.mxu0 0.0
    %1756 = vmatpush1.msra.mxu0 0.0
    %1757 = vmatprep.subr.mxu0 0.0
    %1758 = vmatpush1.msra.mxu0 0.0
    %1759 = vmatprep.subr.mxu0 0.0
    %1760 = vmatpush1.msra.mxu0 0.0
    %1761 = vmatprep.subr.mxu0 0.0
    %1762 = vmatpush1.msra.mxu0 0.0
    %1763 = vmatprep.subr.mxu0 0.0
    %1764 = vmatpush1.msra.mxu0 0.0
    %1765 = vmatprep.mubr.f32.mxu0 0.0
    %1766 = vmatmul.mubr.f32.gmra.mrb[0].mxu0 %v1699
    %v1767 = vpop.f32.mrb[0].mxu0
    %v1768 = vadd.f32 0.0, %v1767
    %v1769 = vpop.f32.mrb[0].mxu0
    %1770 = vdwg.mxu0
    %v1771 = vadd.f32 %v1688, %v1768
    %s1772 = scalar_lea.vmem [#allocation5], 3
    %v1773 = vld [vmem:[%s1772] ss:$4 sm:$0x3]
    %s1774 = scalar_lea.vmem %s4, 96
    %v1775 = vld [vmem:[%s1774] sm:$0xff]
    %v1776 = vld [vmem:[%s1774 + $0x8] sm:$0xff]
    %v1777 = vld [vmem:[%s1774 + $0x10] sm:$0xff]
    %v1778 = vld [vmem:[%s1774 + $0x18] sm:$0xff]
    %v1780 = vsel %vm1524, %v1773, 0
    %1782 = vmatprep.subr.mxu0 0.0
    %1783 = vmatpush1.msra.mxu0 %v1775
    %1784 = vmatprep.subr.mxu0 0.0
    %1785 = vmatpush1.msra.mxu0 %v1776
    %1786 = vmatprep.subr.mxu0 0.0
    %1787 = vmatpush1.msra.mxu0 %v1777
    %1788 = vmatprep.subr.mxu0 0.0
    %1789 = vmatpush1.msra.mxu0 %v1778
    %1790 = vmatprep.subr.mxu0 0.0
    %1791 = vmatpush1.msra.mxu0 0.0
    %1792 = vmatprep.subr.mxu0 0.0
    %1793 = vmatpush1.msra.mxu0 0.0
    %1794 = vmatprep.subr.mxu0 0.0
    %1795 = vmatpush1.msra.mxu0 0.0
    %1796 = vmatprep.subr.mxu0 0.0
    %1797 = vmatpush1.msra.mxu0 0.0
    %1798 = vmatprep.subr.mxu0 0.0
    %1799 = vmatpush1.msra.mxu0 0.0
    %1800 = vmatprep.subr.mxu0 0.0
    %1801 = vmatpush1.msra.mxu0 0.0
    %1802 = vmatprep.subr.mxu0 0.0
    %1803 = vmatpush1.msra.mxu0 0.0
    %1804 = vmatprep.subr.mxu0 0.0
    %1805 = vmatpush1.msra.mxu0 0.0
    %1806 = vmatprep.subr.mxu0 0.0
    %1807 = vmatpush1.msra.mxu0 0.0
    %1808 = vmatprep.subr.mxu0 0.0
    %1809 = vmatpush1.msra.mxu0 0.0
    %1810 = vmatprep.subr.mxu0 0.0
    %1811 = vmatpush1.msra.mxu0 0.0
    %1812 = vmatprep.subr.mxu0 0.0
    %1813 = vmatpush1.msra.mxu0 0.0
    %1814 = vmatprep.subr.mxu0 0.0
    %1815 = vmatpush1.msra.mxu0 0.0
    %1816 = vmatprep.subr.mxu0 0.0
    %1817 = vmatpush1.msra.mxu0 0.0
    %1818 = vmatprep.subr.mxu0 0.0
    %1819 = vmatpush1.msra.mxu0 0.0
    %1820 = vmatprep.subr.mxu0 0.0
    %1821 = vmatpush1.msra.mxu0 0.0
    %1822 = vmatprep.subr.mxu0 0.0
    %1823 = vmatpush1.msra.mxu0 0.0
    %1824 = vmatprep.subr.mxu0 0.0
    %1825 = vmatpush1.msra.mxu0 0.0
    %1826 = vmatprep.subr.mxu0 0.0
    %1827 = vmatpush1.msra.mxu0 0.0
    %1828 = vmatprep.subr.mxu0 0.0
    %1829 = vmatpush1.msra.mxu0 0.0
    %1830 = vmatprep.subr.mxu0 0.0
    %1831 = vmatpush1.msra.mxu0 0.0
    %1832 = vmatprep.subr.mxu0 0.0
    %1833 = vmatpush1.msra.mxu0 0.0
    %1834 = vmatprep.subr.mxu0 0.0
    %1835 = vmatpush1.msra.mxu0 0.0
    %1836 = vmatprep.subr.mxu0 0.0
    %1837 = vmatpush1.msra.mxu0 0.0
    %1838 = vmatprep.subr.mxu0 0.0
    %1839 = vmatpush1.msra.mxu0 0.0
    %1840 = vmatprep.subr.mxu0 0.0
    %1841 = vmatpush1.msra.mxu0 0.0
    %1842 = vmatprep.subr.mxu0 0.0
    %1843 = vmatpush1.msra.mxu0 0.0
    %1844 = vmatprep.subr.mxu0 0.0
    %1845 = vmatpush1.msra.mxu0 0.0
    %1846 = vmatprep.mubr.f32.mxu0 0.0
    %1847 = vmatmul.mubr.f32.gmra.mrb[0].mxu0 %v1780
    %v1848 = vpop.f32.mrb[0].mxu0
    %v1849 = vadd.f32 0.0, %v1848
    %v1850 = vpop.f32.mrb[0].mxu0
    %1851 = vdwg.mxu0
    %v1852 = vadd.f32 %v1771, %v1849
    %v1853 = vld [vmem:[#allocation11] sm:$0x1]
    %v1855 = vlaneseq
    %v1856 = vshrl.u32 %v1855, 7
    %v1857 = vsub.s32 0, %v1856
    %v1858 = vrot.slane %v1853, %v1857
    %v1860 = vadd.f32 %v1852, %v1858
    %vm1861 = vcmp.gt.f32.partialorder %v1860, 0.0
    %v1862 = vmul.f32 %v1860, 0.05
    %v1863 = vsel %vm1861, %v1860, %v1862
    %v1864 = vld [vmem:[%s6] sm:$0xff]
    %v1865 = vld [vmem:[%s6 + $0x8] sm:$0xff]
    %v1866 = vld [vmem:[%s6 + $0x10] sm:$0xff]
    %v1867 = vld [vmem:[%s6 + $0x18] sm:$0xff]
    %v1868 = vld [vmem:[%s6 + $0x20] sm:$0xff]
    %v1869 = vld [vmem:[%s6 + $0x28] sm:$0xff]
    %v1870 = vld [vmem:[%s6 + $0x30] sm:$0xff]
    %v1871 = vld [vmem:[%s6 + $0x38] sm:$0xff]
    %v1872 = vld [vmem:[%s6 + $0x40] sm:$0x1]
    %v1873 = vld [vmem:[#allocation12] sm:$0x1]
    %v1875 = vlaneseq
    %v1876 = vshrl.u32 %v1875, 7
    %v1877 = vsub.s32 0, %v1876
    %v1878 = vrot.slane %v1873, %v1877
    %vm1880 = vcmask 531456
    %v1882 = vsel %vm1880, %v1863, 0
    %v1885 = vsel %vm97, %v1872, 0
    %1887 = vmatprep.subr.mxu0 0.0
    %1888 = vmatpush1.msra.mxu0 %v1864
    %1889 = vmatprep.subr.mxu0 0.0
    %1890 = vmatpush1.msra.mxu0 %v1865
    %1891 = vmatprep.subr.mxu0 0.0
    %1892 = vmatpush1.msra.mxu0 %v1866
    %1893 = vmatprep.subr.mxu0 0.0
    %1894 = vmatpush1.msra.mxu0 %v1867
    %1895 = vmatprep.subr.mxu0 0.0
    %1896 = vmatpush1.msra.mxu0 %v1868
    %1897 = vmatprep.subr.mxu0 0.0
    %1898 = vmatpush1.msra.mxu0 %v1869
    %1899 = vmatprep.subr.mxu0 0.0
    %1900 = vmatpush1.msra.mxu0 %v1870
    %1901 = vmatprep.subr.mxu0 0.0
    %1902 = vmatpush1.msra.mxu0 %v1871
    %1903 = vmatprep.subr.mxu0 0.0
    %1904 = vmatpush1.msra.mxu0 %v1885
    %1905 = vmatprep.subr.mxu0 0.0
    %1906 = vmatpush1.msra.mxu0 0.0
    %1907 = vmatprep.subr.mxu0 0.0
    %1908 = vmatpush1.msra.mxu0 0.0
    %1909 = vmatprep.subr.mxu0 0.0
    %1910 = vmatpush1.msra.mxu0 0.0
    %1911 = vmatprep.subr.mxu0 0.0
    %1912 = vmatpush1.msra.mxu0 0.0
    %1913 = vmatprep.subr.mxu0 0.0
    %1914 = vmatpush1.msra.mxu0 0.0
    %1915 = vmatprep.subr.mxu0 0.0
    %1916 = vmatpush1.msra.mxu0 0.0
    %1917 = vmatprep.subr.mxu0 0.0
    %1918 = vmatpush1.msra.mxu0 0.0
    %1919 = vmatprep.subr.mxu0 0.0
    %1920 = vmatpush1.msra.mxu0 0.0
    %1921 = vmatprep.subr.mxu0 0.0
    %1922 = vmatpush1.msra.mxu0 0.0
    %1923 = vmatprep.subr.mxu0 0.0
    %1924 = vmatpush1.msra.mxu0 0.0
    %1925 = vmatprep.subr.mxu0 0.0
    %1926 = vmatpush1.msra.mxu0 0.0
    %1927 = vmatprep.subr.mxu0 0.0
    %1928 = vmatpush1.msra.mxu0 0.0
    %1929 = vmatprep.subr.mxu0 0.0
    %1930 = vmatpush1.msra.mxu0 0.0
    %1931 = vmatprep.subr.mxu0 0.0
    %1932 = vmatpush1.msra.mxu0 0.0
    %1933 = vmatprep.subr.mxu0 0.0
    %1934 = vmatpush1.msra.mxu0 0.0
    %1935 = vmatprep.subr.mxu0 0.0
    %1936 = vmatpush1.msra.mxu0 0.0
    %1937 = vmatprep.subr.mxu0 0.0
    %1938 = vmatpush1.msra.mxu0 0.0
    %1939 = vmatprep.subr.mxu0 0.0
    %1940 = vmatpush1.msra.mxu0 0.0
    %1941 = vmatprep.subr.mxu0 0.0
    %1942 = vmatpush1.msra.mxu0 0.0
    %1943 = vmatprep.subr.mxu0 0.0
    %1944 = vmatpush1.msra.mxu0 0.0
    %1945 = vmatprep.subr.mxu0 0.0
    %1946 = vmatpush1.msra.mxu0 0.0
    %1947 = vmatprep.subr.mxu0 0.0
    %1948 = vmatpush1.msra.mxu0 0.0
    %1949 = vmatprep.subr.mxu0 0.0
    %1950 = vmatpush1.msra.mxu0 0.0
    %1951 = vmatprep.mubr.f32.mxu0 0.0
    %1952 = vmatmul.mubr.f32.gmra.mrb[0].mxu0 %v1882
    %v1953 = vpop.f32.mrb[0].mxu0
    %v1954 = vadd.f32 %v1878, %v1953
    %v1955 = vpop.f32.mrb[0].mxu0
    %1956 = vdwg.mxu0
    %vm1957 = vcmask 9216
    %1958 = vst.msk [vmem:[#allocation14] sm:$0x3] %vm1957, %v1954
    // Predicated region
    $region50: #{conv_classifier_forward.1} parent=1 // pred_check
      _
    $region51: #{conv_classifier_forward.1} parent=1 // pred_check_branch
      %1960 = sbr.rel (0) target = $region53
    $region52: #{conv_classifier_forward.1} parent=1 // pred_region
      %s1962 = ssub.s32 32, 32
      %1963 = vsyncadd [#allocation8], %s1962
      %s1965 = sshll.u32 [#allocation14], 4
      %s1966 = int_to_ptr.vmem [resolvable:$true] %s1965
      %1968 = dma.vmem_to_hbm [thread:$0]  %s1966, 32, %s8, [#allocation8]
    $region53: #{conv_classifier_forward.1} parent=1 // pred_fallthru
      _
    // Predicated region
    $region54: #{conv_classifier_forward.1} parent=1 // pred_check
      _
    $region55: #{conv_classifier_forward.1} parent=1 // pred_check_branch
      %1970 = sbr.rel (0) target = $region57
    $region56: #{conv_classifier_forward.1} parent=1 // pred_region
      %1971 = dma.done [#allocation8], 32
    $region57: #{conv_classifier_forward.1} parent=1 // pred_fallthru
      _
    %1972 = vsyncpa [#allocation7], 1
    %1973 = vsyncpa [#allocation10], 1
    %1974 = vsyncpa [#allocation13], 1
    %1975 = vsyncpa [#allocation8], 1

</llo_original>
